<compile_context>
chip_gen: v7x
topology: tpu7x:2x2x1
jax: 0.10.0
libtpu: 0.0.40
codegen_flags: <defaults>
</compile_context>

<pallas_src>
import jax
import jax.numpy as jnp
from jax import lax
from jax.experimental import pallas as pl
from jax.experimental.pallas import tpu as pltpu


# --------------------------------------------------------------------------- #
# Kernel
# --------------------------------------------------------------------------- #
def basic_block_kernel(x_ref, w1_ref, w2_ref, sb_ref, out_ref, xpad_s):
    """Fused BasicBlock forward for a block of B images.

    x_ref  : (B, H, W*C)         bf16  image rows, channel-fastest flattened
    w1_ref : (3, W*C, W*C)       bf16  conv1 as 3 block-banded row matrices (per kh)
    w2_ref : (3, W*C, W*C)       bf16  conv2 row matrices
    sb_ref : (8, W*C)            f32   rows 0..3 = bn1 scale, bn1 bias, bn2 scale, bn2 bias
    out_ref: (B, H, W*C)         bf16
    xpad_s : VMEM (B*(H+2), W*C) bf16  padded slab shared by conv1 and conv2
    """
    B, H, WC = x_ref.shape
    S = H + 2                  # per-image padded row stride
    P = B * S                  # total slab rows
    M = P - 2                  # matmul M dimension

    s1 = sb_ref[0:1, :]
    b1 = sb_ref[1:2, :]
    s2 = sb_ref[2:3, :]
    b2 = sb_ref[3:4, :]

    # Zero the whole padded slab (aligned full-tile stores, cheaper than 2*B
    # masked single-row halo stores), then drop the B image interiors in.
    # Per-step zeroing is kept because the "parallel" batch axis may be sharded
    # across TensorCores, each with its own (uninitialized) scratch instance.
    xpad_s[...] = jnp.zeros((P, WC), xpad_s.dtype)
    for b in range(B):
        xpad_s[b * S + 1: b * S + 1 + H, :] = x_ref[b]

    # ---- conv1: 3 lane-dense (M, WC) @ (WC, WC) MXU matmuls, one per kh tap ----
    acc1 = (jnp.dot(xpad_s[0:M, :],     w1_ref[0], preferred_element_type=jnp.float32)
            + jnp.dot(xpad_s[1:M + 1, :], w1_ref[1], preferred_element_type=jnp.float32)
            + jnp.dot(xpad_s[2:M + 2, :], w1_ref[2], preferred_element_type=jnp.float32))

    # ---- bn1 + relu (f32, full 128-lane VPU) -----------------------------------
    h1 = jnp.maximum(acc1 * s1 + b1, 0.0)

    # Reuse the same slab as conv2's padded input: write only the valid interior
    # rows of each image (seam/garbage rows are skipped, so halo rows keep the
    # zeros from the initial clear).
    for b in range(B):
        r0 = b * S
        xpad_s[r0 + 1: r0 + 1 + H, :] = h1[r0: r0 + H, :].astype(xpad_s.dtype)

    # ---- conv2 -----------------------------------------------------------------
    acc2 = (jnp.dot(xpad_s[0:M, :],     w2_ref[0], preferred_element_type=jnp.float32)
            + jnp.dot(xpad_s[1:M + 1, :], w2_ref[1], preferred_element_type=jnp.float32)
            + jnp.dot(xpad_s[2:M + 2, :], w2_ref[2], preferred_element_type=jnp.float32))

    # ---- bn2 + identity residual + relu; extract each image's valid rows --------
    for b in range(B):
        r0 = b * S
        y = acc2[r0: r0 + H, :] * s2 + b2 + x_ref[b].astype(jnp.float32)
        out_ref[b] = jnp.maximum(y, 0.0).astype(out_ref.dtype)


# --------------------------------------------------------------------------- #
# Wrapper / weight prep
# --------------------------------------------------------------------------- #
def fold_bn(gamma, beta, mean, var, eps=1e-5):
    scale = gamma / jnp.sqrt(var + eps)
    return scale, beta - mean * scale


def conv3x3_row_matrices(w_oihw, W):
    """Fold a 3x3 / stride-1 / pad-1 conv into 3 block-banded (W*Cin, W*Cout)
    matrices (one per kh).  A channel-fastest-flattened image row times the
    kh-th matrix yields that row's contribution to the output row; the
    W-direction shifts, W zero padding and channel mixing are all baked in."""
    Cout, Cin, KH, KW = w_oihw.shape
    mats = []
    for kh in range(KH):
        Bm = jnp.zeros((W * Cin, W * Cout), jnp.float32)
        for kw in range(KW):
            # S[j_in, j_out] = 1  iff  j_in == j_out + kw - 1  (valid cols only)
            Ssel = jnp.eye(W, k=1 - kw, dtype=jnp.float32)
            Bm = Bm + jnp.kron(Ssel, w_oihw[:, :, kh, kw].T.astype(jnp.float32))
        mats.append(Bm)
    return jnp.stack(mats, axis=0)                           # (3, W*Cin, W*Cout)


def _pick_batch_block(N, max_b=8):
    for b in range(min(max_b, N), 0, -1):
        if N % b == 0:
            return b
    return 1


def basic_block_forward_nhwc(x_nhwc, p, max_batch_block=8):
    """Fused BasicBlock forward. x_nhwc: (N, H, W, C) f32 -> (N, H, W, C) bf16."""
    N, H, W, C = x_nhwc.shape
    Cout, Cin = p['w1'].shape[0], p['w1'].shape[1]
    assert Cin == C and Cout == C, "identity shortcut needs in_channel == out_channel"
    WC = W * C
    assert WC % 128 == 0, "lane-dense layout requires W*C to be a multiple of 128"
    B = _pick_batch_block(N, max_batch_block)

    s1, b1 = fold_bn(p['g1'], p['beta1'], p['rm1'], p['rv1'])
    s2, b2 = fold_bn(p['g2'], p['beta2'], p['rm2'], p['rv2'])
    # Merge all BN scale/bias vectors (tiled over W) into one (8, WC) f32 input.
    sb = jnp.zeros((8, WC), jnp.float32)
    sb = sb.at[0].set(jnp.tile(s1, W))
    sb = sb.at[1].set(jnp.tile(b1, W))
    sb = sb.at[2].set(jnp.tile(s2, W))
    sb = sb.at[3].set(jnp.tile(b2, W))

    w1m = conv3x3_row_matrices(p['w1'], W).astype(jnp.bfloat16)
    w2m = conv3x3_row_matrices(p['w2'], W).astype(jnp.bfloat16)

    # (N,H,W,C) -> (N,H,W*C): free reshape; channels land lane-fastest so the
    # kernel's minor dim is W*C (= multiple of 128) -> lane-dense loads/stores.
    x_rows = x_nhwc.reshape(N, H, WC).astype(jnp.bfloat16)

    out = pl.pallas_call(
        basic_block_kernel,
        out_shape=jax.ShapeDtypeStruct((N, H, WC), jnp.bfloat16),
        grid=(N // B,),
        in_specs=[
            pl.BlockSpec((B, H, WC), lambda n: (n, 0, 0)),
            pl.BlockSpec((3, WC, WC), lambda n: (0, 0, 0)),
            pl.BlockSpec((3, WC, WC), lambda n: (0, 0, 0)),
            pl.BlockSpec((8, WC), lambda n: (0, 0)),
        ],
        out_specs=pl.BlockSpec((B, H, WC), lambda n: (n, 0, 0)),
        scratch_shapes=[pltpu.VMEM((B * (H + 2), WC), jnp.bfloat16)],
        compiler_params=pltpu.CompilerParams(
            dimension_semantics=("parallel",),
            vmem_limit_bytes=32 * 1024 * 1024),
    )(x_rows, w1m, w2m, sb)

    return out.reshape(N, H, W, C)


def basic_block_forward(x_nchw, p):
    """PyTorch-layout adapter: (N, C, H, W) f32 -> (N, C, H, W) f32.
    If the surrounding model can stay NHWC/bf16, call basic_block_forward_nhwc
    directly and skip the transposes and the f32 upcast."""
    x_nhwc = jnp.transpose(x_nchw, (0, 2, 3, 1))
    out = basic_block_forward_nhwc(x_nhwc, p)
    return jnp.transpose(out, (0, 3, 1, 2)).astype(jnp.float32)


# --------------------------------------------------------------------------- #
# Reference (same operand precision as the kernel: bf16 conv operands,
# f32 accumulation / BN math, eval-mode BatchNorm)
# --------------------------------------------------------------------------- #
def basic_block_reference(x_nchw, p):
    s1, b1 = fold_bn(p['g1'], p['beta1'], p['rm1'], p['rv1'])
    s2, b2 = fold_bn(p['g2'], p['beta2'], p['rm2'], p['rv2'])
    xb = x_nchw.astype(jnp.bfloat16).astype(jnp.float32)
    w1 = p['w1'].astype(jnp.bfloat16).astype(jnp.float32)
    w2 = p['w2'].astype(jnp.bfloat16).astype(jnp.float32)
    dn = ('NCHW', 'OIHW', 'NCHW')
    hp = lax.Precision.HIGHEST
    out = lax.conv_general_dilated(xb, w1, (1, 1), ((1, 1), (1, 1)),
                                   dimension_numbers=dn, precision=hp)
    out = out * s1[None, :, None, None] + b1[None, :, None, None]
    out = jnp.maximum(out, 0.0)
    out = out.astype(jnp.bfloat16).astype(jnp.float32)       # kernel keeps h1 in bf16
    out = lax.conv_general_dilated(out, w2, (1, 1), ((1, 1), (1, 1)),
                                   dimension_numbers=dn, precision=hp)
    out = out * s2[None, :, None, None] + b2[None, :, None, None]
    return jnp.maximum(out + xb, 0.0)


# --------------------------------------------------------------------------- #
if __name__ == "__main__":
    # in_channel == out_channel, stride=1, downsample=None; W*C = 128 (lane-dense)
    # N=16 so the batch-blocked grid has 2 "parallel" steps (keeps both v7x TCs busy).
    N, C, H, W = 16, 8, 16, 16
    key = jax.random.PRNGKey(0)
    ks = jax.random.split(key, 12)

    params = {
        'w1':    jax.random.normal(ks[0], (C, C, 3, 3), jnp.float32) * 0.1,
        'g1':    jax.random.uniform(ks[1], (C,), jnp.float32, 0.5, 1.5),
        'beta1': jax.random.normal(ks[2], (C,), jnp.float32) * 0.1,
        'rm1':   jax.random.normal(ks[3], (C,), jnp.float32) * 0.1,
        'rv1':   jax.random.uniform(ks[4], (C,), jnp.float32, 0.5, 1.5),
        'w2':    jax.random.normal(ks[5], (C, C, 3, 3), jnp.float32) * 0.1,
        'g2':    jax.random.uniform(ks[6], (C,), jnp.float32, 0.5, 1.5),
        'beta2': jax.random.normal(ks[7], (C,), jnp.float32) * 0.1,
        'rm2':   jax.random.normal(ks[8], (C,), jnp.float32) * 0.1,
        'rv2':   jax.random.uniform(ks[9], (C,), jnp.float32, 0.5, 1.5),
    }
    x = jax.random.normal(ks[10], (N, C, H, W), jnp.float32)

    out = jax.block_until_ready(basic_block_forward(x, params))
    ref = jax.block_until_ready(basic_block_reference(x, params))

    assert out.shape == (N, C, H, W)
    assert jnp.allclose(out, ref, rtol=5e-3, atol=5e-3), \
        f"max abs err = {jnp.max(jnp.abs(out - ref))}"
    print("KERNEL_OK")
</pallas_src>

<mosaic_0001>
module attributes {stable_mosaic.version = 11 : i64} {
  func.func @basic_block_kernel(%arg0: i32, %arg1: memref<8x16x128xbf16, #tpu.memory_space<vmem>>, %arg2: memref<3x128x128xbf16, #tpu.memory_space<vmem>>, %arg3: memref<3x128x128xbf16, #tpu.memory_space<vmem>>, %arg4: memref<8x128xf32, #tpu.memory_space<vmem>>, %arg5: memref<8x16x128xbf16, #tpu.memory_space<vmem>>, %arg6: memref<144x128xbf16, #tpu.memory_space<vmem>>) attributes {dimension_semantics = [#tpu.dimension_semantics<parallel>], iteration_bounds = array<i64: 2>, scalar_prefetch = 0 : i64, scratch_operands = 1 : i64, tpu.core_type = #tpu.core_type<tc>, window_params = [{transform_indices = @transform_0, window_bounds = array<i64: 8, 16, 128>}, {pipeline_mode = #tpu.pipeline_mode<synchronous>, transform_indices = @transform_1, window_bounds = array<i64: 3, 128, 128>}, {pipeline_mode = #tpu.pipeline_mode<synchronous>, transform_indices = @transform_2, window_bounds = array<i64: 3, 128, 128>}, {pipeline_mode = #tpu.pipeline_mode<synchronous>, transform_indices = @transform_3, window_bounds = array<i64: 8, 128>}, {transform_indices = @transform_4, window_bounds = array<i64: 8, 16, 128>}]} {
    %c0 = arith.constant 0 : index
    %c0_0 = arith.constant 0 : index
    %0 = vector.load %arg4[%c0, %c0_0] : memref<8x128xf32, #tpu.memory_space<vmem>>, vector<1x128xf32>
    %c1 = arith.constant 1 : index
    %c0_1 = arith.constant 0 : index
    %1 = vector.load %arg4[%c1, %c0_1] : memref<8x128xf32, #tpu.memory_space<vmem>>, vector<1x128xf32>
    %c2 = arith.constant 2 : index
    %c0_2 = arith.constant 0 : index
    %2 = vector.load %arg4[%c2, %c0_2] : memref<8x128xf32, #tpu.memory_space<vmem>>, vector<1x128xf32>
    %c3 = arith.constant 3 : index
    %c0_3 = arith.constant 0 : index
    %3 = vector.load %arg4[%c3, %c0_3] : memref<8x128xf32, #tpu.memory_space<vmem>>, vector<1x128xf32>
    %cst = arith.constant 0.000000e+00 : bf16
    %4 = vector.broadcast %cst : bf16 to vector<144x128xbf16>
    %c0_4 = arith.constant 0 : index
    %c0_5 = arith.constant 0 : index
    %5 = vector.load %arg6[%c0_4, %c0_5] : memref<144x128xbf16, #tpu.memory_space<vmem>>, vector<144x128xbf16>
    tpu.vector_store %arg6[%c0_4, %c0_5], %4 {strides = array<i32>} : memref<144x128xbf16, #tpu.memory_space<vmem>>, vector<144x128xbf16>,
    %c0_6 = arith.constant 0 : index
    %c0_7 = arith.constant 0 : index
    %c0_8 = arith.constant 0 : index
    %6 = vector.load %arg1[%c0_6, %c0_7, %c0_8] : memref<8x16x128xbf16, #tpu.memory_space<vmem>>, vector<1x16x128xbf16>
    %7 = vector.shape_cast %6 : vector<1x16x128xbf16> to vector<16x128xbf16>
    %c1_9 = arith.constant 1 : index
    %c0_10 = arith.constant 0 : index
    %8 = vector.load %arg6[%c1_9, %c0_10] : memref<144x128xbf16, #tpu.memory_space<vmem>>, vector<16x128xbf16>
    tpu.vector_store %arg6[%c1_9, %c0_10], %7 {strides = array<i32>} : memref<144x128xbf16, #tpu.memory_space<vmem>>, vector<16x128xbf16>,
    %c1_11 = arith.constant 1 : index
    %c0_12 = arith.constant 0 : index
    %c0_13 = arith.constant 0 : index
    %9 = vector.load %arg1[%c1_11, %c0_12, %c0_13] : memref<8x16x128xbf16, #tpu.memory_space<vmem>>, vector<1x16x128xbf16>
    %10 = vector.shape_cast %9 : vector<1x16x128xbf16> to vector<16x128xbf16>
    %c19 = arith.constant 19 : index
    %c0_14 = arith.constant 0 : index
    %11 = vector.load %arg6[%c19, %c0_14] : memref<144x128xbf16, #tpu.memory_space<vmem>>, vector<16x128xbf16>
    tpu.vector_store %arg6[%c19, %c0_14], %10 {strides = array<i32>} : memref<144x128xbf16, #tpu.memory_space<vmem>>, vector<16x128xbf16>,
    %c2_15 = arith.constant 2 : index
    %c0_16 = arith.constant 0 : index
    %c0_17 = arith.constant 0 : index
    %12 = vector.load %arg1[%c2_15, %c0_16, %c0_17] : memref<8x16x128xbf16, #tpu.memory_space<vmem>>, vector<1x16x128xbf16>
    %13 = vector.shape_cast %12 : vector<1x16x128xbf16> to vector<16x128xbf16>
    %c37 = arith.constant 37 : index
    %c0_18 = arith.constant 0 : index
    %14 = vector.load %arg6[%c37, %c0_18] : memref<144x128xbf16, #tpu.memory_space<vmem>>, vector<16x128xbf16>
    tpu.vector_store %arg6[%c37, %c0_18], %13 {strides = array<i32>} : memref<144x128xbf16, #tpu.memory_space<vmem>>, vector<16x128xbf16>,
    %c3_19 = arith.constant 3 : index
    %c0_20 = arith.constant 0 : index
    %c0_21 = arith.constant 0 : index
    %15 = vector.load %arg1[%c3_19, %c0_20, %c0_21] : memref<8x16x128xbf16, #tpu.memory_space<vmem>>, vector<1x16x128xbf16>
    %16 = vector.shape_cast %15 : vector<1x16x128xbf16> to vector<16x128xbf16>
    %c55 = arith.constant 55 : index
    %c0_22 = arith.constant 0 : index
    %17 = vector.load %arg6[%c55, %c0_22] : memref<144x128xbf16, #tpu.memory_space<vmem>>, vector<16x128xbf16>
    tpu.vector_store %arg6[%c55, %c0_22], %16 {strides = array<i32>} : memref<144x128xbf16, #tpu.memory_space<vmem>>, vector<16x128xbf16>,
    %c4 = arith.constant 4 : index
    %c0_23 = arith.constant 0 : index
    %c0_24 = arith.constant 0 : index
    %18 = vector.load %arg1[%c4, %c0_23, %c0_24] : memref<8x16x128xbf16, #tpu.memory_space<vmem>>, vector<1x16x128xbf16>
    %19 = vector.shape_cast %18 : vector<1x16x128xbf16> to vector<16x128xbf16>
    %c73 = arith.constant 73 : index
    %c0_25 = arith.constant 0 : index
    %20 = vector.load %arg6[%c73, %c0_25] : memref<144x128xbf16, #tpu.memory_space<vmem>>, vector<16x128xbf16>
    tpu.vector_store %arg6[%c73, %c0_25], %19 {strides = array<i32>} : memref<144x128xbf16, #tpu.memory_space<vmem>>, vector<16x128xbf16>,
    %c5 = arith.constant 5 : index
    %c0_26 = arith.constant 0 : index
    %c0_27 = arith.constant 0 : index
    %21 = vector.load %arg1[%c5, %c0_26, %c0_27] : memref<8x16x128xbf16, #tpu.memory_space<vmem>>, vector<1x16x128xbf16>
    %22 = vector.shape_cast %21 : vector<1x16x128xbf16> to vector<16x128xbf16>
    %c91 = arith.constant 91 : index
    %c0_28 = arith.constant 0 : index
    %23 = vector.load %arg6[%c91, %c0_28] : memref<144x128xbf16, #tpu.memory_space<vmem>>, vector<16x128xbf16>
    tpu.vector_store %arg6[%c91, %c0_28], %22 {strides = array<i32>} : memref<144x128xbf16, #tpu.memory_space<vmem>>, vector<16x128xbf16>,
    %c6 = arith.constant 6 : index
    %c0_29 = arith.constant 0 : index
    %c0_30 = arith.constant 0 : index
    %24 = vector.load %arg1[%c6, %c0_29, %c0_30] : memref<8x16x128xbf16, #tpu.memory_space<vmem>>, vector<1x16x128xbf16>
    %25 = vector.shape_cast %24 : vector<1x16x128xbf16> to vector<16x128xbf16>
    %c109 = arith.constant 109 : index
    %c0_31 = arith.constant 0 : index
    %26 = vector.load %arg6[%c109, %c0_31] : memref<144x128xbf16, #tpu.memory_space<vmem>>, vector<16x128xbf16>
    tpu.vector_store %arg6[%c109, %c0_31], %25 {strides = array<i32>} : memref<144x128xbf16, #tpu.memory_space<vmem>>, vector<16x128xbf16>,
    %c7 = arith.constant 7 : index
    %c0_32 = arith.constant 0 : index
    %c0_33 = arith.constant 0 : index
    %27 = vector.load %arg1[%c7, %c0_32, %c0_33] : memref<8x16x128xbf16, #tpu.memory_space<vmem>>, vector<1x16x128xbf16>
    %28 = vector.shape_cast %27 : vector<1x16x128xbf16> to vector<16x128xbf16>
    %c127 = arith.constant 127 : index
    %c0_34 = arith.constant 0 : index
    %29 = vector.load %arg6[%c127, %c0_34] : memref<144x128xbf16, #tpu.memory_space<vmem>>, vector<16x128xbf16>
    tpu.vector_store %arg6[%c127, %c0_34], %28 {strides = array<i32>} : memref<144x128xbf16, #tpu.memory_space<vmem>>, vector<16x128xbf16>,
    %c0_35 = arith.constant 0 : index
    %c0_36 = arith.constant 0 : index
    %30 = vector.load %arg6[%c0_35, %c0_36] : memref<144x128xbf16, #tpu.memory_space<vmem>>, vector<142x128xbf16>
    %c0_37 = arith.constant 0 : index
    %c0_38 = arith.constant 0 : index
    %c0_39 = arith.constant 0 : index
    %31 = vector.load %arg2[%c0_37, %c0_38, %c0_39] : memref<3x128x128xbf16, #tpu.memory_space<vmem>>, vector<1x128x128xbf16>
    %32 = vector.shape_cast %31 : vector<1x128x128xbf16> to vector<128x128xbf16>
    %cst_40 = arith.constant dense<0.000000e+00> : vector<142x128xf32>
    %33 = tpu.matmul %30, %32, %cst_40 {dimension_numbers = #tpu.dot_dimension_numbers<[1], [0], [0], [1], [0, 0, 1, 1], [], []>} : vector<142x128xbf16>, vector<128x128xbf16>, vector<142x128xf32> -> vector<142x128xf32>
    %c1_41 = arith.constant 1 : index
    %c0_42 = arith.constant 0 : index
    %34 = vector.load %arg6[%c1_41, %c0_42] : memref<144x128xbf16, #tpu.memory_space<vmem>>, vector<142x128xbf16>
    %c1_43 = arith.constant 1 : index
    %c0_44 = arith.constant 0 : index
    %c0_45 = arith.constant 0 : index
    %35 = vector.load %arg2[%c1_43, %c0_44, %c0_45] : memref<3x128x128xbf16, #tpu.memory_space<vmem>>, vector<1x128x128xbf16>
    %36 = vector.shape_cast %35 : vector<1x128x128xbf16> to vector<128x128xbf16>
    %cst_46 = arith.constant dense<0.000000e+00> : vector<142x128xf32>
    %37 = tpu.matmul %34, %36, %cst_46 {dimension_numbers = #tpu.dot_dimension_numbers<[1], [0], [0], [1], [0, 0, 1, 1], [], []>} : vector<142x128xbf16>, vector<128x128xbf16>, vector<142x128xf32> -> vector<142x128xf32>
    %38 = arith.addf %33, %37 : vector<142x128xf32>
    %c2_47 = arith.constant 2 : index
    %c0_48 = arith.constant 0 : index
    %39 = vector.load %arg6[%c2_47, %c0_48] : memref<144x128xbf16, #tpu.memory_space<vmem>>, vector<142x128xbf16>
    %c2_49 = arith.constant 2 : index
    %c0_50 = arith.constant 0 : index
    %c0_51 = arith.constant 0 : index
    %40 = vector.load %arg2[%c2_49, %c0_50, %c0_51] : memref<3x128x128xbf16, #tpu.memory_space<vmem>>, vector<1x128x128xbf16>
    %41 = vector.shape_cast %40 : vector<1x128x128xbf16> to vector<128x128xbf16>
    %cst_52 = arith.constant dense<0.000000e+00> : vector<142x128xf32>
    %42 = tpu.matmul %39, %41, %cst_52 {dimension_numbers = #tpu.dot_dimension_numbers<[1], [0], [0], [1], [0, 0, 1, 1], [], []>} : vector<142x128xbf16>, vector<128x128xbf16>, vector<142x128xf32> -> vector<142x128xf32>
    %43 = arith.addf %38, %42 : vector<142x128xf32>
    %44 = vector.broadcast %0 : vector<1x128xf32> to vector<142x128xf32>
    %45 = arith.mulf %43, %44 : vector<142x128xf32>
    %46 = vector.broadcast %1 : vector<1x128xf32> to vector<142x128xf32>
    %47 = arith.addf %45, %46 : vector<142x128xf32>
    %cst_53 = arith.constant 0.000000e+00 : f32
    %48 = vector.broadcast %cst_53 : f32 to vector<142x128xf32>
    %49 = arith.maximumf %47, %48 : vector<142x128xf32>
    %50 = vector.extract_strided_slice %49 {offsets = [0, 0], sizes = [16, 128], strides = [1, 1]} : vector<142x128xf32> to vector<16x128xf32>
    %51 = arith.truncf %50 : vector<16x128xf32> to vector<16x128xbf16>
    %c1_54 = arith.constant 1 : index
    %c0_55 = arith.constant 0 : index
    %52 = vector.load %arg6[%c1_54, %c0_55] : memref<144x128xbf16, #tpu.memory_space<vmem>>, vector<16x128xbf16>
    tpu.vector_store %arg6[%c1_54, %c0_55], %51 {strides = array<i32>} : memref<144x128xbf16, #tpu.memory_space<vmem>>, vector<16x128xbf16>,
    %53 = vector.extract_strided_slice %49 {offsets = [18, 0], sizes = [16, 128], strides = [1, 1]} : vector<142x128xf32> to vector<16x128xf32>
    %54 = arith.truncf %53 : vector<16x128xf32> to vector<16x128xbf16>
    %c19_56 = arith.constant 19 : index
    %c0_57 = arith.constant 0 : index
    %55 = vector.load %arg6[%c19_56, %c0_57] : memref<144x128xbf16, #tpu.memory_space<vmem>>, vector<16x128xbf16>
    tpu.vector_store %arg6[%c19_56, %c0_57], %54 {strides = array<i32>} : memref<144x128xbf16, #tpu.memory_space<vmem>>, vector<16x128xbf16>,
    %56 = vector.extract_strided_slice %49 {offsets = [36, 0], sizes = [16, 128], strides = [1, 1]} : vector<142x128xf32> to vector<16x128xf32>
    %57 = arith.truncf %56 : vector<16x128xf32> to vector<16x128xbf16>
    %c37_58 = arith.constant 37 : index
    %c0_59 = arith.constant 0 : index
    %58 = vector.load %arg6[%c37_58, %c0_59] : memref<144x128xbf16, #tpu.memory_space<vmem>>, vector<16x128xbf16>
    tpu.vector_store %arg6[%c37_58, %c0_59], %57 {strides = array<i32>} : memref<144x128xbf16, #tpu.memory_space<vmem>>, vector<16x128xbf16>,
    %59 = vector.extract_strided_slice %49 {offsets = [54, 0], sizes = [16, 128], strides = [1, 1]} : vector<142x128xf32> to vector<16x128xf32>
    %60 = arith.truncf %59 : vector<16x128xf32> to vector<16x128xbf16>
    %c55_60 = arith.constant 55 : index
    %c0_61 = arith.constant 0 : index
    %61 = vector.load %arg6[%c55_60, %c0_61] : memref<144x128xbf16, #tpu.memory_space<vmem>>, vector<16x128xbf16>
    tpu.vector_store %arg6[%c55_60, %c0_61], %60 {strides = array<i32>} : memref<144x128xbf16, #tpu.memory_space<vmem>>, vector<16x128xbf16>,
    %62 = vector.extract_strided_slice %49 {offsets = [72, 0], sizes = [16, 128], strides = [1, 1]} : vector<142x128xf32> to vector<16x128xf32>
    %63 = arith.truncf %62 : vector<16x128xf32> to vector<16x128xbf16>
    %c73_62 = arith.constant 73 : index
    %c0_63 = arith.constant 0 : index
    %64 = vector.load %arg6[%c73_62, %c0_63] : memref<144x128xbf16, #tpu.memory_space<vmem>>, vector<16x128xbf16>
    tpu.vector_store %arg6[%c73_62, %c0_63], %63 {strides = array<i32>} : memref<144x128xbf16, #tpu.memory_space<vmem>>, vector<16x128xbf16>,
    %65 = vector.extract_strided_slice %49 {offsets = [90, 0], sizes = [16, 128], strides = [1, 1]} : vector<142x128xf32> to vector<16x128xf32>
    %66 = arith.truncf %65 : vector<16x128xf32> to vector<16x128xbf16>
    %c91_64 = arith.constant 91 : index
    %c0_65 = arith.constant 0 : index
    %67 = vector.load %arg6[%c91_64, %c0_65] : memref<144x128xbf16, #tpu.memory_space<vmem>>, vector<16x128xbf16>
    tpu.vector_store %arg6[%c91_64, %c0_65], %66 {strides = array<i32>} : memref<144x128xbf16, #tpu.memory_space<vmem>>, vector<16x128xbf16>,
    %68 = vector.extract_strided_slice %49 {offsets = [108, 0], sizes = [16, 128], strides = [1, 1]} : vector<142x128xf32> to vector<16x128xf32>
    %69 = arith.truncf %68 : vector<16x128xf32> to vector<16x128xbf16>
    %c109_66 = arith.constant 109 : index
    %c0_67 = arith.constant 0 : index
    %70 = vector.load %arg6[%c109_66, %c0_67] : memref<144x128xbf16, #tpu.memory_space<vmem>>, vector<16x128xbf16>
    tpu.vector_store %arg6[%c109_66, %c0_67], %69 {strides = array<i32>} : memref<144x128xbf16, #tpu.memory_space<vmem>>, vector<16x128xbf16>,
    %71 = vector.extract_strided_slice %49 {offsets = [126, 0], sizes = [16, 128], strides = [1, 1]} : vector<142x128xf32> to vector<16x128xf32>
    %72 = arith.truncf %71 : vector<16x128xf32> to vector<16x128xbf16>
    %c127_68 = arith.constant 127 : index
    %c0_69 = arith.constant 0 : index
    %73 = vector.load %arg6[%c127_68, %c0_69] : memref<144x128xbf16, #tpu.memory_space<vmem>>, vector<16x128xbf16>
    tpu.vector_store %arg6[%c127_68, %c0_69], %72 {strides = array<i32>} : memref<144x128xbf16, #tpu.memory_space<vmem>>, vector<16x128xbf16>,
    %c0_70 = arith.constant 0 : index
    %c0_71 = arith.constant 0 : index
    %74 = vector.load %arg6[%c0_70, %c0_71] : memref<144x128xbf16, #tpu.memory_space<vmem>>, vector<142x128xbf16>
    %c0_72 = arith.constant 0 : index
    %c0_73 = arith.constant 0 : index
    %c0_74 = arith.constant 0 : index
    %75 = vector.load %arg3[%c0_72, %c0_73, %c0_74] : memref<3x128x128xbf16, #tpu.memory_space<vmem>>, vector<1x128x128xbf16>
    %76 = vector.shape_cast %75 : vector<1x128x128xbf16> to vector<128x128xbf16>
    %cst_75 = arith.constant dense<0.000000e+00> : vector<142x128xf32>
    %77 = tpu.matmul %74, %76, %cst_75 {dimension_numbers = #tpu.dot_dimension_numbers<[1], [0], [0], [1], [0, 0, 1, 1], [], []>} : vector<142x128xbf16>, vector<128x128xbf16>, vector<142x128xf32> -> vector<142x128xf32>
    %c1_76 = arith.constant 1 : index
    %c0_77 = arith.constant 0 : index
    %78 = vector.load %arg6[%c1_76, %c0_77] : memref<144x128xbf16, #tpu.memory_space<vmem>>, vector<142x128xbf16>
    %c1_78 = arith.constant 1 : index
    %c0_79 = arith.constant 0 : index
    %c0_80 = arith.constant 0 : index
    %79 = vector.load %arg3[%c1_78, %c0_79, %c0_80] : memref<3x128x128xbf16, #tpu.memory_space<vmem>>, vector<1x128x128xbf16>
    %80 = vector.shape_cast %79 : vector<1x128x128xbf16> to vector<128x128xbf16>
    %cst_81 = arith.constant dense<0.000000e+00> : vector<142x128xf32>
    %81 = tpu.matmul %78, %80, %cst_81 {dimension_numbers = #tpu.dot_dimension_numbers<[1], [0], [0], [1], [0, 0, 1, 1], [], []>} : vector<142x128xbf16>, vector<128x128xbf16>, vector<142x128xf32> -> vector<142x128xf32>
    %82 = arith.addf %77, %81 : vector<142x128xf32>
    %c2_82 = arith.constant 2 : index
    %c0_83 = arith.constant 0 : index
    %83 = vector.load %arg6[%c2_82, %c0_83] : memref<144x128xbf16, #tpu.memory_space<vmem>>, vector<142x128xbf16>
    %c2_84 = arith.constant 2 : index
    %c0_85 = arith.constant 0 : index
    %c0_86 = arith.constant 0 : index
    %84 = vector.load %arg3[%c2_84, %c0_85, %c0_86] : memref<3x128x128xbf16, #tpu.memory_space<vmem>>, vector<1x128x128xbf16>
    %85 = vector.shape_cast %84 : vector<1x128x128xbf16> to vector<128x128xbf16>
    %cst_87 = arith.constant dense<0.000000e+00> : vector<142x128xf32>
    %86 = tpu.matmul %83, %85, %cst_87 {dimension_numbers = #tpu.dot_dimension_numbers<[1], [0], [0], [1], [0, 0, 1, 1], [], []>} : vector<142x128xbf16>, vector<128x128xbf16>, vector<142x128xf32> -> vector<142x128xf32>
    %87 = arith.addf %82, %86 : vector<142x128xf32>
    %88 = vector.extract_strided_slice %87 {offsets = [0, 0], sizes = [16, 128], strides = [1, 1]} : vector<142x128xf32> to vector<16x128xf32>
    %89 = vector.broadcast %2 : vector<1x128xf32> to vector<16x128xf32>
    %90 = arith.mulf %88, %89 : vector<16x128xf32>
    %91 = vector.broadcast %3 : vector<1x128xf32> to vector<16x128xf32>
    %92 = arith.addf %90, %91 : vector<16x128xf32>
    %c0_88 = arith.constant 0 : index
    %c0_89 = arith.constant 0 : index
    %c0_90 = arith.constant 0 : index
    %93 = vector.load %arg1[%c0_88, %c0_89, %c0_90] : memref<8x16x128xbf16, #tpu.memory_space<vmem>>, vector<1x16x128xbf16>
    %94 = vector.shape_cast %93 : vector<1x16x128xbf16> to vector<16x128xbf16>
    %95 = arith.extf %94 : vector<16x128xbf16> to vector<16x128xf32>
    %96 = arith.addf %92, %95 : vector<16x128xf32>
    %cst_91 = arith.constant 0.000000e+00 : f32
    %97 = vector.broadcast %cst_91 : f32 to vector<16x128xf32>
    %98 = arith.maximumf %96, %97 : vector<16x128xf32>
    %99 = arith.truncf %98 : vector<16x128xf32> to vector<16x128xbf16>
    %c0_92 = arith.constant 0 : index
    %c0_93 = arith.constant 0 : index
    %c0_94 = arith.constant 0 : index
    %100 = vector.load %arg5[%c0_92, %c0_93, %c0_94] : memref<8x16x128xbf16, #tpu.memory_space<vmem>>, vector<1x16x128xbf16>
    %101 = vector.shape_cast %100 : vector<1x16x128xbf16> to vector<16x128xbf16>
    %102 = vector.shape_cast %99 : vector<16x128xbf16> to vector<1x16x128xbf16>
    tpu.vector_store %arg5[%c0_92, %c0_93, %c0_94], %102 {strides = array<i32>} : memref<8x16x128xbf16, #tpu.memory_space<vmem>>, vector<1x16x128xbf16>,
    %103 = vector.extract_strided_slice %87 {offsets = [18, 0], sizes = [16, 128], strides = [1, 1]} : vector<142x128xf32> to vector<16x128xf32>
    %104 = vector.broadcast %2 : vector<1x128xf32> to vector<16x128xf32>
    %105 = arith.mulf %103, %104 : vector<16x128xf32>
    %106 = vector.broadcast %3 : vector<1x128xf32> to vector<16x128xf32>
    %107 = arith.addf %105, %106 : vector<16x128xf32>
    %c1_95 = arith.constant 1 : index
    %c0_96 = arith.constant 0 : index
    %c0_97 = arith.constant 0 : index
    %108 = vector.load %arg1[%c1_95, %c0_96, %c0_97] : memref<8x16x128xbf16, #tpu.memory_space<vmem>>, vector<1x16x128xbf16>
    %109 = vector.shape_cast %108 : vector<1x16x128xbf16> to vector<16x128xbf16>
    %110 = arith.extf %109 : vector<16x128xbf16> to vector<16x128xf32>
    %111 = arith.addf %107, %110 : vector<16x128xf32>
    %cst_98 = arith.constant 0.000000e+00 : f32
    %112 = vector.broadcast %cst_98 : f32 to vector<16x128xf32>
    %113 = arith.maximumf %111, %112 : vector<16x128xf32>
    %114 = arith.truncf %113 : vector<16x128xf32> to vector<16x128xbf16>
    %c1_99 = arith.constant 1 : index
    %c0_100 = arith.constant 0 : index
    %c0_101 = arith.constant 0 : index
    %115 = vector.load %arg5[%c1_99, %c0_100, %c0_101] : memref<8x16x128xbf16, #tpu.memory_space<vmem>>, vector<1x16x128xbf16>
    %116 = vector.shape_cast %115 : vector<1x16x128xbf16> to vector<16x128xbf16>
    %117 = vector.shape_cast %114 : vector<16x128xbf16> to vector<1x16x128xbf16>
    tpu.vector_store %arg5[%c1_99, %c0_100, %c0_101], %117 {strides = array<i32>} : memref<8x16x128xbf16, #tpu.memory_space<vmem>>, vector<1x16x128xbf16>,
    %118 = vector.extract_strided_slice %87 {offsets = [36, 0], sizes = [16, 128], strides = [1, 1]} : vector<142x128xf32> to vector<16x128xf32>
    %119 = vector.broadcast %2 : vector<1x128xf32> to vector<16x128xf32>
    %120 = arith.mulf %118, %119 : vector<16x128xf32>
    %121 = vector.broadcast %3 : vector<1x128xf32> to vector<16x128xf32>
    %122 = arith.addf %120, %121 : vector<16x128xf32>
    %c2_102 = arith.constant 2 : index
    %c0_103 = arith.constant 0 : index
    %c0_104 = arith.constant 0 : index
    %123 = vector.load %arg1[%c2_102, %c0_103, %c0_104] : memref<8x16x128xbf16, #tpu.memory_space<vmem>>, vector<1x16x128xbf16>
    %124 = vector.shape_cast %123 : vector<1x16x128xbf16> to vector<16x128xbf16>
    %125 = arith.extf %124 : vector<16x128xbf16> to vector<16x128xf32>
    %126 = arith.addf %122, %125 : vector<16x128xf32>
    %cst_105 = arith.constant 0.000000e+00 : f32
    %127 = vector.broadcast %cst_105 : f32 to vector<16x128xf32>
    %128 = arith.maximumf %126, %127 : vector<16x128xf32>
    %129 = arith.truncf %128 : vector<16x128xf32> to vector<16x128xbf16>
    %c2_106 = arith.constant 2 : index
    %c0_107 = arith.constant 0 : index
    %c0_108 = arith.constant 0 : index
    %130 = vector.load %arg5[%c2_106, %c0_107, %c0_108] : memref<8x16x128xbf16, #tpu.memory_space<vmem>>, vector<1x16x128xbf16>
    %131 = vector.shape_cast %130 : vector<1x16x128xbf16> to vector<16x128xbf16>
    %132 = vector.shape_cast %129 : vector<16x128xbf16> to vector<1x16x128xbf16>
    tpu.vector_store %arg5[%c2_106, %c0_107, %c0_108], %132 {strides = array<i32>} : memref<8x16x128xbf16, #tpu.memory_space<vmem>>, vector<1x16x128xbf16>,
    %133 = vector.extract_strided_slice %87 {offsets = [54, 0], sizes = [16, 128], strides = [1, 1]} : vector<142x128xf32> to vector<16x128xf32>
    %134 = vector.broadcast %2 : vector<1x128xf32> to vector<16x128xf32>
    %135 = arith.mulf %133, %134 : vector<16x128xf32>
    %136 = vector.broadcast %3 : vector<1x128xf32> to vector<16x128xf32>
    %137 = arith.addf %135, %136 : vector<16x128xf32>
    %c3_109 = arith.constant 3 : index
    %c0_110 = arith.constant 0 : index
    %c0_111 = arith.constant 0 : index
    %138 = vector.load %arg1[%c3_109, %c0_110, %c0_111] : memref<8x16x128xbf16, #tpu.memory_space<vmem>>, vector<1x16x128xbf16>
    %139 = vector.shape_cast %138 : vector<1x16x128xbf16> to vector<16x128xbf16>
    %140 = arith.extf %139 : vector<16x128xbf16> to vector<16x128xf32>
    %141 = arith.addf %137, %140 : vector<16x128xf32>
    %cst_112 = arith.constant 0.000000e+00 : f32
    %142 = vector.broadcast %cst_112 : f32 to vector<16x128xf32>
    %143 = arith.maximumf %141, %142 : vector<16x128xf32>
    %144 = arith.truncf %143 : vector<16x128xf32> to vector<16x128xbf16>
    %c3_113 = arith.constant 3 : index
    %c0_114 = arith.constant 0 : index
    %c0_115 = arith.constant 0 : index
    %145 = vector.load %arg5[%c3_113, %c0_114, %c0_115] : memref<8x16x128xbf16, #tpu.memory_space<vmem>>, vector<1x16x128xbf16>
    %146 = vector.shape_cast %145 : vector<1x16x128xbf16> to vector<16x128xbf16>
    %147 = vector.shape_cast %144 : vector<16x128xbf16> to vector<1x16x128xbf16>
    tpu.vector_store %arg5[%c3_113, %c0_114, %c0_115], %147 {strides = array<i32>} : memref<8x16x128xbf16, #tpu.memory_space<vmem>>, vector<1x16x128xbf16>,
    %148 = vector.extract_strided_slice %87 {offsets = [72, 0], sizes = [16, 128], strides = [1, 1]} : vector<142x128xf32> to vector<16x128xf32>
    %149 = vector.broadcast %2 : vector<1x128xf32> to vector<16x128xf32>
    %150 = arith.mulf %148, %149 : vector<16x128xf32>
    %151 = vector.broadcast %3 : vector<1x128xf32> to vector<16x128xf32>
    %152 = arith.addf %150, %151 : vector<16x128xf32>
    %c4_116 = arith.constant 4 : index
    %c0_117 = arith.constant 0 : index
    %c0_118 = arith.constant 0 : index
    %153 = vector.load %arg1[%c4_116, %c0_117, %c0_118] : memref<8x16x128xbf16, #tpu.memory_space<vmem>>, vector<1x16x128xbf16>
    %154 = vector.shape_cast %153 : vector<1x16x128xbf16> to vector<16x128xbf16>
    %155 = arith.extf %154 : vector<16x128xbf16> to vector<16x128xf32>
    %156 = arith.addf %152, %155 : vector<16x128xf32>
    %cst_119 = arith.constant 0.000000e+00 : f32
    %157 = vector.broadcast %cst_119 : f32 to vector<16x128xf32>
    %158 = arith.maximumf %156, %157 : vector<16x128xf32>
    %159 = arith.truncf %158 : vector<16x128xf32> to vector<16x128xbf16>
    %c4_120 = arith.constant 4 : index
    %c0_121 = arith.constant 0 : index
    %c0_122 = arith.constant 0 : index
    %160 = vector.load %arg5[%c4_120, %c0_121, %c0_122] : memref<8x16x128xbf16, #tpu.memory_space<vmem>>, vector<1x16x128xbf16>
    %161 = vector.shape_cast %160 : vector<1x16x128xbf16> to vector<16x128xbf16>
    %162 = vector.shape_cast %159 : vector<16x128xbf16> to vector<1x16x128xbf16>
    tpu.vector_store %arg5[%c4_120, %c0_121, %c0_122], %162 {strides = array<i32>} : memref<8x16x128xbf16, #tpu.memory_space<vmem>>, vector<1x16x128xbf16>,
    %163 = vector.extract_strided_slice %87 {offsets = [90, 0], sizes = [16, 128], strides = [1, 1]} : vector<142x128xf32> to vector<16x128xf32>
    %164 = vector.broadcast %2 : vector<1x128xf32> to vector<16x128xf32>
    %165 = arith.mulf %163, %164 : vector<16x128xf32>
    %166 = vector.broadcast %3 : vector<1x128xf32> to vector<16x128xf32>
    %167 = arith.addf %165, %166 : vector<16x128xf32>
    %c5_123 = arith.constant 5 : index
    %c0_124 = arith.constant 0 : index
    %c0_125 = arith.constant 0 : index
    %168 = vector.load %arg1[%c5_123, %c0_124, %c0_125] : memref<8x16x128xbf16, #tpu.memory_space<vmem>>, vector<1x16x128xbf16>
    %169 = vector.shape_cast %168 : vector<1x16x128xbf16> to vector<16x128xbf16>
    %170 = arith.extf %169 : vector<16x128xbf16> to vector<16x128xf32>
    %171 = arith.addf %167, %170 : vector<16x128xf32>
    %cst_126 = arith.constant 0.000000e+00 : f32
    %172 = vector.broadcast %cst_126 : f32 to vector<16x128xf32>
    %173 = arith.maximumf %171, %172 : vector<16x128xf32>
    %174 = arith.truncf %173 : vector<16x128xf32> to vector<16x128xbf16>
    %c5_127 = arith.constant 5 : index
    %c0_128 = arith.constant 0 : index
    %c0_129 = arith.constant 0 : index
    %175 = vector.load %arg5[%c5_127, %c0_128, %c0_129] : memref<8x16x128xbf16, #tpu.memory_space<vmem>>, vector<1x16x128xbf16>
    %176 = vector.shape_cast %175 : vector<1x16x128xbf16> to vector<16x128xbf16>
    %177 = vector.shape_cast %174 : vector<16x128xbf16> to vector<1x16x128xbf16>
    tpu.vector_store %arg5[%c5_127, %c0_128, %c0_129], %177 {strides = array<i32>} : memref<8x16x128xbf16, #tpu.memory_space<vmem>>, vector<1x16x128xbf16>,
    %178 = vector.extract_strided_slice %87 {offsets = [108, 0], sizes = [16, 128], strides = [1, 1]} : vector<142x128xf32> to vector<16x128xf32>
    %179 = vector.broadcast %2 : vector<1x128xf32> to vector<16x128xf32>
    %180 = arith.mulf %178, %179 : vector<16x128xf32>
    %181 = vector.broadcast %3 : vector<1x128xf32> to vector<16x128xf32>
    %182 = arith.addf %180, %181 : vector<16x128xf32>
    %c6_130 = arith.constant 6 : index
    %c0_131 = arith.constant 0 : index
    %c0_132 = arith.constant 0 : index
    %183 = vector.load %arg1[%c6_130, %c0_131, %c0_132] : memref<8x16x128xbf16, #tpu.memory_space<vmem>>, vector<1x16x128xbf16>
    %184 = vector.shape_cast %183 : vector<1x16x128xbf16> to vector<16x128xbf16>
    %185 = arith.extf %184 : vector<16x128xbf16> to vector<16x128xf32>
    %186 = arith.addf %182, %185 : vector<16x128xf32>
    %cst_133 = arith.constant 0.000000e+00 : f32
    %187 = vector.broadcast %cst_133 : f32 to vector<16x128xf32>
    %188 = arith.maximumf %186, %187 : vector<16x128xf32>
    %189 = arith.truncf %188 : vector<16x128xf32> to vector<16x128xbf16>
    %c6_134 = arith.constant 6 : index
    %c0_135 = arith.constant 0 : index
    %c0_136 = arith.constant 0 : index
    %190 = vector.load %arg5[%c6_134, %c0_135, %c0_136] : memref<8x16x128xbf16, #tpu.memory_space<vmem>>, vector<1x16x128xbf16>
    %191 = vector.shape_cast %190 : vector<1x16x128xbf16> to vector<16x128xbf16>
    %192 = vector.shape_cast %189 : vector<16x128xbf16> to vector<1x16x128xbf16>
    tpu.vector_store %arg5[%c6_134, %c0_135, %c0_136], %192 {strides = array<i32>} : memref<8x16x128xbf16, #tpu.memory_space<vmem>>, vector<1x16x128xbf16>,
    %193 = vector.extract_strided_slice %87 {offsets = [126, 0], sizes = [16, 128], strides = [1, 1]} : vector<142x128xf32> to vector<16x128xf32>
    %194 = vector.broadcast %2 : vector<1x128xf32> to vector<16x128xf32>
    %195 = arith.mulf %193, %194 : vector<16x128xf32>
    %196 = vector.broadcast %3 : vector<1x128xf32> to vector<16x128xf32>
    %197 = arith.addf %195, %196 : vector<16x128xf32>
    %c7_137 = arith.constant 7 : index
    %c0_138 = arith.constant 0 : index
    %c0_139 = arith.constant 0 : index
    %198 = vector.load %arg1[%c7_137, %c0_138, %c0_139] : memref<8x16x128xbf16, #tpu.memory_space<vmem>>, vector<1x16x128xbf16>
    %199 = vector.shape_cast %198 : vector<1x16x128xbf16> to vector<16x128xbf16>
    %200 = arith.extf %199 : vector<16x128xbf16> to vector<16x128xf32>
    %201 = arith.addf %197, %200 : vector<16x128xf32>
    %cst_140 = arith.constant 0.000000e+00 : f32
    %202 = vector.broadcast %cst_140 : f32 to vector<16x128xf32>
    %203 = arith.maximumf %201, %202 : vector<16x128xf32>
    %204 = arith.truncf %203 : vector<16x128xf32> to vector<16x128xbf16>
    %c7_141 = arith.constant 7 : index
    %c0_142 = arith.constant 0 : index
    %c0_143 = arith.constant 0 : index
    %205 = vector.load %arg5[%c7_141, %c0_142, %c0_143] : memref<8x16x128xbf16, #tpu.memory_space<vmem>>, vector<1x16x128xbf16>
    %206 = vector.shape_cast %205 : vector<1x16x128xbf16> to vector<16x128xbf16>
    %207 = vector.shape_cast %204 : vector<16x128xbf16> to vector<1x16x128xbf16>
    tpu.vector_store %arg5[%c7_141, %c0_142, %c0_143], %207 {strides = array<i32>} : memref<8x16x128xbf16, #tpu.memory_space<vmem>>, vector<1x16x128xbf16>,
    return
  }
  func.func @transform_0(%arg0: i32) -> (i32, i32, i32) {
    %c0_i32 = arith.constant 0 : i32
    %c0_i32_0 = arith.constant 0 : i32
    %c0_i32_1 = arith.constant 0 : i32
    return %arg0, %c0_i32, %c0_i32_0 : i32, i32, i32
  }
  func.func @transform_1(%arg0: i32) -> (i32, i32, i32) {
    %c0_i32 = arith.constant 0 : i32
    %c0_i32_0 = arith.constant 0 : i32
    %c0_i32_1 = arith.constant 0 : i32
    %c0_i32_2 = arith.constant 0 : i32
    return %c0_i32, %c0_i32_0, %c0_i32_1 : i32, i32, i32
  }
  func.func @transform_2(%arg0: i32) -> (i32, i32, i32) {
    %c0_i32 = arith.constant 0 : i32
    %c0_i32_0 = arith.constant 0 : i32
    %c0_i32_1 = arith.constant 0 : i32
    %c0_i32_2 = arith.constant 0 : i32
    return %c0_i32, %c0_i32_0, %c0_i32_1 : i32, i32, i32
  }
  func.func @transform_3(%arg0: i32) -> (i32, i32) {
    %c0_i32 = arith.constant 0 : i32
    %c0_i32_0 = arith.constant 0 : i32
    %c0_i32_1 = arith.constant 0 : i32
    return %c0_i32, %c0_i32_0 : i32, i32
  }
  func.func @transform_4(%arg0: i32) -> (i32, i32, i32) {
    %c0_i32 = arith.constant 0 : i32
    %c0_i32_0 = arith.constant 0 : i32
    %c0_i32_1 = arith.constant 0 : i32
    return %arg0, %c0_i32, %c0_i32_0 : i32, i32, i32
  }
}

</mosaic_0001>

<llo_original>
// kernel: tpu_custom_call.1
$region0: #{tpu_custom_call.1}
  #allocation0 [shape = 'u32[]', space=smem, size = 0x4, offset = 0x4, fixed_abs, tag = 'smem constant byte address 0x4 - core index']
  #allocation1 [shape = 'u32[144,128]{1,0:T(1,128)}', space=vmem, size = 0x12000, scoped, tag = 'internal scratch']
  #allocation2 [shape = 'bf16[144,128]{1,0:T(16,128)(2,1)}', space=vmem, size = 0x9000, scoped, tag = 'scratch operand']
  %s0 = inlined_call_operand.hbm [shape: bf16[16,16,128], index: 0, kind: input, shape index: {}]
  %s1 = inlined_call_operand.hbm [shape: bf16[3,128,128], index: 1, kind: input, shape index: {}]
  %s2 = inlined_call_operand.hbm [shape: bf16[3,128,128], index: 2, kind: input, shape index: {}]
  %s3 = inlined_call_operand.vmem [shape: f32[8,128], index: 3, kind: input, shape index: {}]
  %s4 = inlined_call_operand.hbm [shape: bf16[16,16,128], index: 4, kind: output, shape index: {}]
  %s5 = sld [smem:[#allocation0]]
  $region61: #{tpu_custom_call.1} parent=0
    _
  %s7 = ssub.s32 1, %s5
  %s8 = scalar_select 0, %s7, %s5
  $region1: #{tpu_custom_call.1} parent=0
    #allocation3 [shape = 'u8[65536]{0}', space=vmem, size = 0x10000, scoped, tag = 'input window, operand 0']
    #allocation4 [shape = 's32[2]{0}', space=sflag, size = 0x8, scoped, tag = 'scoped memory for tpu_custom_call.1']
    #allocation5 [shape = 's32[2]{0}', space=sflag, size = 0x8, scoped, tag = 'scoped memory for tpu_custom_call.1']
    #allocation6 [shape = 'u8[98304]{0}', space=vmem, size = 0x18000, scoped, tag = 'input window, operand 1, single buffered']
    #allocation7 [shape = 's32[1]{0}', space=sflag, size = 0x4, scoped, tag = 'scoped memory for tpu_custom_call.1']
    #allocation8 [shape = 'u8[98304]{0}', space=vmem, size = 0x18000, scoped, tag = 'input window, operand 2, single buffered']
    #allocation9 [shape = 'u8[65536]{0}', space=vmem, size = 0x10000, scoped, tag = 'output window, operand 0']
    %9 = vsyncpa [#allocation4], 0
    %s10 = scalar_lea.sflag [#allocation4], 1
    %11 = vsyncpa %s10, 0
    %12 = vsyncpa [#allocation7], 0
    %13 = vsyncpa [#allocation5], 0
    %s14 = scalar_lea.sflag [#allocation5], 1
    %15 = vsyncpa %s14, 0
    loop: start=0, step=1, limit=4
    $region2: #{tpu_custom_call.1} parent=1 // loop_pre_header
      _
    $region3: #{tpu_custom_call.1} parent=1 // loop_header
      %s17 = sphi 0, %s21
      %p18 = scmp.ge.s32.totalorder %s17, 4
      %s27 = sphi 0, %s29
      %s30 = sphi 0, %s27
      %s31 = sphi 0, %s30
      %s47 = sphi 0, %s31
      %s51 = sphi 0, %s51
      %s53 = sphi 0, %s51
      %s54 = sphi 0, %s53
      %s68 = sphi 0, %s54
      %s72 = sphi 0, %s72
      %s74 = sphi 0, %s72
      %s75 = sphi 0, %s74
      %s89 = sphi 0, %s75
      %s93 = sphi 0, %s93
      %s95 = sphi 0, %s93
      %s96 = sphi 0, %s95
      %s110 = sphi 0, %s96
      %s116 = sphi 0, %s118
      %s119 = sphi 0, %s116
      %s120 = sphi 0, %s119
      %s136 = sphi 0, %s120
    $region4: #{tpu_custom_call.1} parent=1 // loop_header_branch
      %20 = sbr.rel (%p18) target = $region8
    $region5: #{tpu_custom_call.1} parent=1 // loop_body
      %s22 = ssub.s32 %s17, 1
      %s23 = ssub.s32 %s17, 2
      %s24 = sadd.s32 %s17, 1
      %s25 = ssub.s32 %s17, %s24
      %p26 = scmp.eq.s32.totalorder %s25, 0
      %s28 = sadd.s32 %s27, 1
      %s29 = scalar_select %p26, %s27, %s28
      %p32 = pneg %p26
      %p33 = scmp.eq.s32.totalorder %s17, 1
      %p34 = por %p32, %p33
      %p35 = scmp.ne.s32.totalorder %s27, %s30
      %p36 = scmp.eq.s32.totalorder %s17, 0
      %p37 = por %p35, %p36
      %p38 = scmp.ne.s32.totalorder %s27, %s30
      %p39 = scmp.eq.s32.totalorder %s22, 1
      %p40 = por %p38, %p39
      %p41 = scmp.ne.s32.totalorder %s30, %s31
      %p42 = scmp.eq.s32.totalorder %s22, 0
      %p43 = por %p41, %p42
      %p44 = scmp.ne.s32.totalorder %s30, %s31
      %p45 = scmp.eq.s32.totalorder %s23, 1
      %p46 = por %p44, %p45
      %p48 = scmp.ne.s32.totalorder %s31, %s47
      %p49 = scmp.eq.s32.totalorder %s23, 0
      %p50 = por %p48, %p49
      %s52 = sadd.s32 %s51, 1
      %p55 = scmp.eq.s32.totalorder %s17, 1
      %p56 = scmp.ne.s32.totalorder %s51, %s53
      %p57 = scmp.eq.s32.totalorder %s17, 0
      %p58 = por %p56, %p57
      %p59 = scmp.ne.s32.totalorder %s51, %s53
      %p60 = scmp.eq.s32.totalorder %s22, 1
      %p61 = por %p59, %p60
      %p62 = scmp.ne.s32.totalorder %s53, %s54
      %p63 = scmp.eq.s32.totalorder %s22, 0
      %p64 = por %p62, %p63
      %p65 = scmp.ne.s32.totalorder %s53, %s54
      %p66 = scmp.eq.s32.totalorder %s23, 1
      %p67 = por %p65, %p66
      %p69 = scmp.ne.s32.totalorder %s54, %s68
      %p70 = scmp.eq.s32.totalorder %s23, 0
      %p71 = por %p69, %p70
      %s73 = sadd.s32 %s72, 1
      %p76 = scmp.eq.s32.totalorder %s17, 1
      %p77 = scmp.ne.s32.totalorder %s72, %s74
      %p78 = scmp.eq.s32.totalorder %s17, 0
      %p79 = por %p77, %p78
      %p80 = scmp.ne.s32.totalorder %s72, %s74
      %p81 = scmp.eq.s32.totalorder %s22, 1
      %p82 = por %p80, %p81
      %p83 = scmp.ne.s32.totalorder %s74, %s75
      %p84 = scmp.eq.s32.totalorder %s22, 0
      %p85 = por %p83, %p84
      %p86 = scmp.ne.s32.totalorder %s74, %s75
      %p87 = scmp.eq.s32.totalorder %s23, 1
      %p88 = por %p86, %p87
      %p90 = scmp.ne.s32.totalorder %s75, %s89
      %p91 = scmp.eq.s32.totalorder %s23, 0
      %p92 = por %p90, %p91
      %s94 = sadd.s32 %s93, 1
      %p97 = scmp.eq.s32.totalorder %s17, 1
      %p98 = scmp.ne.s32.totalorder %s93, %s95
      %p99 = scmp.eq.s32.totalorder %s17, 0
      %p100 = por %p98, %p99
      %p101 = scmp.ne.s32.totalorder %s93, %s95
      %p102 = scmp.eq.s32.totalorder %s22, 1
      %p103 = por %p101, %p102
      %p104 = scmp.ne.s32.totalorder %s95, %s96
      %p105 = scmp.eq.s32.totalorder %s22, 0
      %p106 = por %p104, %p105
      %p107 = scmp.ne.s32.totalorder %s95, %s96
      %p108 = scmp.eq.s32.totalorder %s23, 1
      %p109 = por %p107, %p108
      %p111 = scmp.ne.s32.totalorder %s96, %s110
      %p112 = scmp.eq.s32.totalorder %s23, 0
      %p113 = por %p111, %p112
      %s114 = ssub.s32 %s17, %s24
      %p115 = scmp.eq.s32.totalorder %s114, 0
      %s117 = sadd.s32 %s116, 1
      %s118 = scalar_select %p115, %s116, %s117
      %p121 = pneg %p115
      %p122 = scmp.eq.s32.totalorder %s17, 1
      %p123 = por %p121, %p122
      %p124 = scmp.ne.s32.totalorder %s116, %s119
      %p125 = scmp.eq.s32.totalorder %s17, 0
      %p126 = por %p124, %p125
      %p127 = scmp.ne.s32.totalorder %s116, %s119
      %p128 = scmp.eq.s32.totalorder %s22, 1
      %p129 = por %p127, %p128
      %p130 = scmp.ne.s32.totalorder %s119, %s120
      %p131 = scmp.eq.s32.totalorder %s22, 0
      %p132 = por %p130, %p131
      %p133 = scmp.ne.s32.totalorder %s119, %s120
      %p134 = scmp.eq.s32.totalorder %s23, 1
      %p135 = por %p133, %p134
      %p137 = scmp.ne.s32.totalorder %s120, %s136
      %p138 = scmp.eq.s32.totalorder %s23, 0
      %p139 = por %p137, %p138
      %p140 = scmp.le.s32.totalorder 1, %s17
      %p141 = scmp.lt.s32.totalorder %s17, 3
      %p142 = pnand %p140, %p141
      %p143 = pneg %p142
      // Predicated region
      $region9: #{tpu_custom_call.1} parent=5 // pred_check
        _
      $region10: #{tpu_custom_call.1} parent=5 // pred_check_branch
        %145 = sbr.rel (%p142) target = $region12
      $region11: #{tpu_custom_call.1} parent=5 // pred_region
        %s146 = ssub.s32 %s17, 1
        // Predicated region
        $region13: #{tpu_custom_call.1} parent=11 // pred_check
          %p147 = pneg %p64
        $region14: #{tpu_custom_call.1} parent=11 // pred_check_branch
          %149 = sbr.rel (%p147) target = $region16
        $region15: #{tpu_custom_call.1} parent=11 // pred_region
          %s151 = ssub.s32 3072, 3072
          %152 = vsyncadd [#allocation7], %s151
          %s153 = sshll.u32 [#allocation6], 4
          %s154 = int_to_ptr.vmem [resolvable:$true] %s153
          %159 = dma.hbm_to_vmem [thread:$0]  %s1, 3072, %s154, [#allocation7], 64, 64, 4
        $region16: #{tpu_custom_call.1} parent=11 // pred_fallthru
          _
        // Predicated region
        $region17: #{tpu_custom_call.1} parent=11 // pred_check
          %p160 = pneg %p85
        $region18: #{tpu_custom_call.1} parent=11 // pred_check_branch
          %162 = sbr.rel (%p160) target = $region20
        $region19: #{tpu_custom_call.1} parent=11 // pred_region
          %s164 = ssub.s32 3072, 3072
          %165 = vsyncadd [#allocation7], %s164
          %s166 = sshll.u32 [#allocation8], 4
          %s167 = int_to_ptr.vmem [resolvable:$true] %s166
          %172 = dma.hbm_to_vmem [thread:$0]  %s2, 3072, %s167, [#allocation7], 64, 64, 4
        $region20: #{tpu_custom_call.1} parent=11 // pred_fallthru
          _
        // Predicated region
        $region21: #{tpu_custom_call.1} parent=11 // pred_check
          %p173 = pneg %p106
        $region22: #{tpu_custom_call.1} parent=11 // pred_check_branch
          %175 = sbr.rel (%p173) target = $region24
        $region23: #{tpu_custom_call.1} parent=11 // pred_region
          _
        $region24: #{tpu_custom_call.1} parent=11 // pred_fallthru
          _
      $region12: #{tpu_custom_call.1} parent=5 // pred_fallthru
        _
      %p176 = scmp.lt.s32.totalorder %s17, 2
      // Predicated region
      $region25: #{tpu_custom_call.1} parent=5 // pred_check
        %p177 = pneg %p176
      $region26: #{tpu_custom_call.1} parent=5 // pred_check_branch
        %179 = sbr.rel (%p177) target = $region28
      $region27: #{tpu_custom_call.1} parent=5 // pred_region
        // Predicated region
        $region29: #{tpu_custom_call.1} parent=27 // pred_check
          %p180 = pneg %p37
        $region30: #{tpu_custom_call.1} parent=27 // pred_check_branch
          %182 = sbr.rel (%p180) target = $region32
        $region31: #{tpu_custom_call.1} parent=27 // pred_region
          %s183 = sand.u32 %s27, 1
          %s184 = scalar_lea.sflag [#allocation4], %s183
          %s185 = sand.u32 %s27, 1
          %s186 = smul.addr %s185, 64
          %s187 = scalar_lea.vmem [#allocation3], %s186
          %s188 = smul.u32 8, %s17
          %s190 = ssub.s32 1024, 1024
          %191 = vsyncadd %s184, %s190
          %s192 = smul.addr %s188, 2
          %s193 = smul.addr %s192, 64
          %s194 = scalar_lea.hbm %s0, %s193
          %s195 = sshll.u32 %s187, 4
          %s196 = int_to_ptr.vmem [resolvable:$true] %s195
          %201 = dma.hbm_to_vmem [thread:$0]  %s194, 1024, %s196, %s184, 64, 64, 4
        $region32: #{tpu_custom_call.1} parent=27 // pred_fallthru
          _
      $region28: #{tpu_custom_call.1} parent=5 // pred_fallthru
        _
      %p202 = scmp.le.s32.totalorder 1, %s17
      %p203 = scmp.lt.s32.totalorder %s17, 3
      %p204 = pnand %p202, %p203
      %p205 = pneg %p204
      // Predicated region
      $region33: #{tpu_custom_call.1} parent=5 // pred_check
        _
      $region34: #{tpu_custom_call.1} parent=5 // pred_check_branch
        %207 = sbr.rel (%p204) target = $region36
      $region35: #{tpu_custom_call.1} parent=5 // pred_region
        %s208 = ssub.s32 %s17, 1
        %s209 = sand.u32 %s30, 1
        %s210 = scalar_lea.sflag [#allocation4], %s209
        %s211 = sand.u32 %s30, 1
        %s212 = smul.addr %s211, 64
        %s213 = scalar_lea.vmem [#allocation3], %s212
        // Predicated region
        $region37: #{tpu_custom_call.1} parent=35 // pred_check
          %p214 = pneg %p43
        $region38: #{tpu_custom_call.1} parent=35 // pred_check_branch
          %216 = sbr.rel (%p214) target = $region40
        $region39: #{tpu_custom_call.1} parent=35 // pred_region
          %217 = dma.done %s210, 1024
        $region40: #{tpu_custom_call.1} parent=35 // pred_fallthru
          _
        // Predicated region
        $region41: #{tpu_custom_call.1} parent=35 // pred_check
          %p218 = pneg %p64
        $region42: #{tpu_custom_call.1} parent=35 // pred_check_branch
          %220 = sbr.rel (%p218) target = $region44
        $region43: #{tpu_custom_call.1} parent=35 // pred_region
          %221 = dma.done [#allocation7], 3072
        $region44: #{tpu_custom_call.1} parent=35 // pred_fallthru
          _
        // Predicated region
        $region45: #{tpu_custom_call.1} parent=35 // pred_check
          %p222 = pneg %p85
        $region46: #{tpu_custom_call.1} parent=35 // pred_check_branch
          %224 = sbr.rel (%p222) target = $region48
        $region47: #{tpu_custom_call.1} parent=35 // pred_region
          %225 = dma.done [#allocation7], 3072
        $region48: #{tpu_custom_call.1} parent=35 // pred_fallthru
          _
        %s226 = sand.u32 %s30, 1
        %s227 = scalar_lea.sflag [#allocation4], %s226
        %s228 = sand.u32 %s30, 1
        %s229 = smul.addr %s228, 64
        %s230 = scalar_lea.vmem [#allocation3], %s229
        %p231 = pneg %p43
        %p232 = pneg %p40
        %p233 = pneg %p64
        %p234 = pneg %p61
        %p235 = pneg %p85
        %p236 = pneg %p82
        %p237 = pneg %p106
        %p238 = pneg %p103
        %p239 = pneg %p132
        %p240 = pneg %p129
        %s241 = sand.u32 %s119, 1
        %s242 = scalar_lea.sflag [#allocation5], %s241
        %s243 = sand.u32 %s119, 1
        %s244 = smul.addr %s243, 64
        %s245 = scalar_lea.vmem [#allocation9], %s244
        %s246 = smul.u32 8, %s22
        %s247 = smul.u32 8, %s22
        %v249 = vld [vmem:[%s3] sm:$0x1]
        %v250 = vld [vmem:[%s3 + $0x1] sm:$0x1]
        %v251 = vld [vmem:[%s3 + $0x2] sm:$0x1]
        %v252 = vld [vmem:[%s3 + $0x3] sm:$0x1]
        %253 = vst [vmem:[#allocation2] sm:$0xff] 0
        %254 = vst [vmem:[#allocation2 + $0x8] sm:$0xff] 0
        %255 = vst [vmem:[#allocation2 + $0x10] sm:$0xff] 0
        %256 = vst [vmem:[#allocation2 + $0x18] sm:$0xff] 0
        %257 = vst [vmem:[#allocation2 + $0x20] sm:$0xff] 0
        %258 = vst [vmem:[#allocation2 + $0x28] sm:$0xff] 0
        %259 = vst [vmem:[#allocation2 + $0x30] sm:$0xff] 0
        %260 = vst [vmem:[#allocation2 + $0x38] sm:$0xff] 0
        %261 = vst [vmem:[#allocation2 + $0x40] sm:$0xff] 0
        %v262 = vld [vmem:[%s213] sm:$0xf]
        %v263 = vld [vmem:[%s213 + $0x4] sm:$0xf]
        %v266 = vunpack.c.l.b16 %v262
        %v267 = vunpack.c.l.b16 %v263
        %v268 = vpack.c.b16 %v267, %v266
        %v270 = vshrl.u32 %v268, 16
        %v272 = vrot.slane %v270, 7
        %v273 = vshll.u32 %v268, 16
        %v275 = vor.u32 %v272, %v273
        %vm278 = vcmask 1047552
        %vm279 = vsmask.f32 7938
        %vm280 = vmand %vm278, %vm279
        %v281 = vld [vmem:[#allocation2] sm:$0xff]
        %v282 = vsel %vm280, %v275, %v281
        %283 = vst [vmem:[#allocation2] sm:$0xff] %v282
        %vm284 = vcmask 1040384
        %vm285 = vsmask.f32 256
        %vm286 = vmand %vm284, %vm285
        %v287 = vld [vmem:[#allocation2 + $0x8] sm:$0x1]
        %v288 = vsel %vm286, %v272, %v287
        %289 = vst [vmem:[#allocation2 + $0x8] sm:$0x1] %v288
        %s290 = scalar_lea.vmem %s213, 8 [#allocation3]
        %v291 = vld [vmem:[%s290] sm:$0xf]
        %v292 = vld [vmem:[%s290 + $0x4] sm:$0xf]
        %v295 = vunpack.c.l.b16 %v291
        %v296 = vunpack.c.l.b16 %v292
        %v297 = vpack.c.b16 %v296, %v295
        %v299 = vshrl.u32 %v297, 16
        %v301 = vrot.slane %v299, 6
        %v302 = vshll.u32 %v297, 16
        %v304 = vrot.slane %v302, 7
        %v305 = vor.u32 %v301, %v304
        %vm307 = vcmask 1047553
        %vm308 = vsmask.f32 7942
        %vm309 = vmand %vm307, %vm308
        %v310 = vld [vmem:[#allocation2 + $0x8] sm:$0xfe]
        %v311 = vsel %vm309, %v305, %v310
        %312 = vst [vmem:[#allocation2 + $0x8] sm:$0xfe] %v311
        %vm313 = vcmask 1041408
        %vm314 = vsmask.f32 1280
        %vm315 = vmand %vm313, %vm314
        %v316 = vld [vmem:[#allocation2 + $0x10] sm:$0x3]
        %v317 = vsel %vm315, %v305, %v316
        %318 = vst [vmem:[#allocation2 + $0x10] sm:$0x3] %v317
        %s319 = scalar_lea.vmem %s213, 16 [#allocation3]
        %v320 = vld [vmem:[%s319] sm:$0xf]
        %v321 = vld [vmem:[%s319 + $0x4] sm:$0xf]
        %v324 = vunpack.c.l.b16 %v320
        %v325 = vunpack.c.l.b16 %v321
        %v326 = vpack.c.b16 %v325, %v324
        %v328 = vshrl.u32 %v326, 16
        %v330 = vrot.slane %v328, 5
        %v331 = vshll.u32 %v326, 16
        %v333 = vrot.slane %v331, 6
        %v334 = vor.u32 %v330, %v333
        %vm336 = vcmask 1047554
        %vm337 = vsmask.f32 7946
        %vm338 = vmand %vm336, %vm337
        %v339 = vld [vmem:[#allocation2 + $0x10] sm:$0xfc]
        %v340 = vsel %vm338, %v334, %v339
        %341 = vst [vmem:[#allocation2 + $0x10] sm:$0xfc] %v340
        %vm342 = vcmask 1042432
        %vm343 = vsmask.f32 2304
        %vm344 = vmand %vm342, %vm343
        %v345 = vld [vmem:[#allocation2 + $0x18] sm:$0x7]
        %v346 = vsel %vm344, %v334, %v345
        %347 = vst [vmem:[#allocation2 + $0x18] sm:$0x7] %v346
        %s348 = scalar_lea.vmem %s213, 24 [#allocation3]
        %v349 = vld [vmem:[%s348] sm:$0xf]
        %v350 = vld [vmem:[%s348 + $0x4] sm:$0xf]
        %v353 = vunpack.c.l.b16 %v349
        %v354 = vunpack.c.l.b16 %v350
        %v355 = vpack.c.b16 %v354, %v353
        %v357 = vshrl.u32 %v355, 16
        %v359 = vrot.slane %v357, 4
        %v360 = vshll.u32 %v355, 16
        %v362 = vrot.slane %v360, 5
        %v363 = vor.u32 %v359, %v362
        %vm365 = vcmask 1047555
        %vm366 = vsmask.f32 7950
        %vm367 = vmand %vm365, %vm366
        %v368 = vld [vmem:[#allocation2 + $0x18] sm:$0xf8]
        %v369 = vsel %vm367, %v363, %v368
        %370 = vst [vmem:[#allocation2 + $0x18] sm:$0xf8] %v369
        %vm371 = vcmask 1043456
        %vm372 = vsmask.f32 3328
        %vm373 = vmand %vm371, %vm372
        %v374 = vld [vmem:[#allocation2 + $0x20] sm:$0xf]
        %v375 = vsel %vm373, %v363, %v374
        %376 = vst [vmem:[#allocation2 + $0x20] sm:$0xf] %v375
        %s377 = scalar_lea.vmem %s213, 32 [#allocation3]
        %v378 = vld [vmem:[%s377] sm:$0xf]
        %v379 = vld [vmem:[%s377 + $0x4] sm:$0xf]
        %v382 = vunpack.c.l.b16 %v378
        %v383 = vunpack.c.l.b16 %v379
        %v384 = vpack.c.b16 %v383, %v382
        %v386 = vshrl.u32 %v384, 16
        %v388 = vrot.slane %v386, 3
        %v389 = vshll.u32 %v384, 16
        %v391 = vrot.slane %v389, 4
        %v392 = vor.u32 %v388, %v391
        %vm394 = vcmask 1047556
        %vm395 = vsmask.f32 7954
        %vm396 = vmand %vm394, %vm395
        %v397 = vld [vmem:[#allocation2 + $0x20] sm:$0xf0]
        %v398 = vsel %vm396, %v392, %v397
        %399 = vst [vmem:[#allocation2 + $0x20] sm:$0xf0] %v398
        %vm400 = vcmask 1044480
        %vm401 = vsmask.f32 4352
        %vm402 = vmand %vm400, %vm401
        %v403 = vld [vmem:[#allocation2 + $0x28] sm:$0x1f]
        %v404 = vsel %vm402, %v392, %v403
        %405 = vst [vmem:[#allocation2 + $0x28] sm:$0x1f] %v404
        %s406 = scalar_lea.vmem %s213, 40 [#allocation3]
        %v407 = vld [vmem:[%s406] sm:$0xf]
        %v408 = vld [vmem:[%s406 + $0x4] sm:$0xf]
        %v411 = vunpack.c.l.b16 %v407
        %v412 = vunpack.c.l.b16 %v408
        %v413 = vpack.c.b16 %v412, %v411
        %v415 = vshrl.u32 %v413, 16
        %v417 = vrot.slane %v415, 2
        %v418 = vshll.u32 %v413, 16
        %v420 = vrot.slane %v418, 3
        %v421 = vor.u32 %v417, %v420
        %vm423 = vcmask 1047557
        %vm424 = vsmask.f32 7958
        %vm425 = vmand %vm423, %vm424
        %v426 = vld [vmem:[#allocation2 + $0x28] sm:$0xe0]
        %v427 = vsel %vm425, %v421, %v426
        %428 = vst [vmem:[#allocation2 + $0x28] sm:$0xe0] %v427
        %vm429 = vcmask 1045504
        %vm430 = vsmask.f32 5376
        %vm431 = vmand %vm429, %vm430
        %v432 = vld [vmem:[#allocation2 + $0x30] sm:$0x3f]
        %v433 = vsel %vm431, %v421, %v432
        %434 = vst [vmem:[#allocation2 + $0x30] sm:$0x3f] %v433
        %s435 = scalar_lea.vmem %s213, 48 [#allocation3]
        %v436 = vld [vmem:[%s435] sm:$0xf]
        %v437 = vld [vmem:[%s435 + $0x4] sm:$0xf]
        %v440 = vunpack.c.l.b16 %v436
        %v441 = vunpack.c.l.b16 %v437
        %v442 = vpack.c.b16 %v441, %v440
        %v444 = vshrl.u32 %v442, 16
        %v446 = vrot.slane %v444, 1
        %v447 = vshll.u32 %v442, 16
        %v449 = vrot.slane %v447, 2
        %v450 = vor.u32 %v446, %v449
        %vm452 = vcmask 1047558
        %vm453 = vsmask.f32 7962
        %vm454 = vmand %vm452, %vm453
        %v455 = vld [vmem:[#allocation2 + $0x30] sm:$0xc0]
        %v456 = vsel %vm454, %v450, %v455
        %457 = vst [vmem:[#allocation2 + $0x30] sm:$0xc0] %v456
        %vm458 = vcmask 1046528
        %vm459 = vsmask.f32 6400
        %vm460 = vmand %vm458, %vm459
        %v461 = vld [vmem:[#allocation2 + $0x38] sm:$0x7f]
        %v462 = vsel %vm460, %v450, %v461
        %463 = vst [vmem:[#allocation2 + $0x38] sm:$0x7f] %v462
        %s464 = scalar_lea.vmem %s213, 56 [#allocation3]
        %v465 = vld [vmem:[%s464] sm:$0xf]
        %v466 = vld [vmem:[%s464 + $0x4] sm:$0xf]
        %v469 = vunpack.c.l.b16 %v465
        %v470 = vunpack.c.l.b16 %v466
        %v471 = vpack.c.b16 %v470, %v469
        %v473 = vshll.u32 %v471, 16
        %v475 = vrot.slane %v473, 1
        %v476 = vshrl.u32 %v471, 16
        %v478 = vor.u32 %v476, %v475
        %vm481 = vcmask 1047559
        %vm482 = vsmask.f32 7966
        %vm483 = vmand %vm481, %vm482
        %v484 = vld [vmem:[#allocation2 + $0x38] sm:$0x80]
        %v485 = vsel %vm483, %v475, %v484
        %486 = vst [vmem:[#allocation2 + $0x38] sm:$0x80] %v485
        %vm487 = vsmask.f32 7424
        %vm488 = vmand %vm278, %vm487
        %v489 = vld [vmem:[#allocation2 + $0x40] sm:$0xff]
        %v490 = vsel %vm488, %v478, %v489
        %491 = vst [vmem:[#allocation2 + $0x40] sm:$0xff] %v490
        %v492 = vld [vmem:[#allocation2] sm:$0xff]
        %v493 = vld [vmem:[#allocation2 + $0x8] sm:$0xff]
        %v494 = vld [vmem:[#allocation2 + $0x10] sm:$0xff]
        %v495 = vld [vmem:[#allocation2 + $0x18] sm:$0xff]
        %v496 = vld [vmem:[#allocation2 + $0x20] sm:$0xff]
        %v497 = vld [vmem:[#allocation2 + $0x28] sm:$0xff]
        %v498 = vld [vmem:[#allocation2 + $0x30] sm:$0xff]
        %v499 = vld [vmem:[#allocation2 + $0x38] sm:$0xff]
        %v500 = vld [vmem:[#allocation2 + $0x40] sm:$0x7f]
        %v501 = vld [vmem:[#allocation6] sm:$0xf]
        %v502 = vld [vmem:[#allocation6 + $0x4] sm:$0xf]
        %v503 = vld [vmem:[#allocation6 + $0x8] sm:$0xf]
        %v504 = vld [vmem:[#allocation6 + $0xc] sm:$0xf]
        %v505 = vld [vmem:[#allocation6 + $0x10] sm:$0xf]
        %v506 = vld [vmem:[#allocation6 + $0x14] sm:$0xf]
        %v507 = vld [vmem:[#allocation6 + $0x18] sm:$0xf]
        %v508 = vld [vmem:[#allocation6 + $0x1c] sm:$0xf]
        %v509 = vld [vmem:[#allocation6 + $0x20] sm:$0xf]
        %v510 = vld [vmem:[#allocation6 + $0x24] sm:$0xf]
        %v511 = vld [vmem:[#allocation6 + $0x28] sm:$0xf]
        %v512 = vld [vmem:[#allocation6 + $0x2c] sm:$0xf]
        %v513 = vld [vmem:[#allocation6 + $0x30] sm:$0xf]
        %v514 = vld [vmem:[#allocation6 + $0x34] sm:$0xf]
        %v515 = vld [vmem:[#allocation6 + $0x38] sm:$0xf]
        %v516 = vld [vmem:[#allocation6 + $0x3c] sm:$0xf]
        %v517 = vld [vmem:[#allocation2 + $0x40] sm:$0xff]
        %s518 = scalar_lea.vmem [#allocation6], 64
        %v519 = vld [vmem:[%s518] sm:$0xf]
        %v520 = vld [vmem:[%s518 + $0x4] sm:$0xf]
        %v521 = vld [vmem:[%s518 + $0x8] sm:$0xf]
        %v522 = vld [vmem:[%s518 + $0xc] sm:$0xf]
        %v523 = vld [vmem:[%s518 + $0x10] sm:$0xf]
        %v524 = vld [vmem:[%s518 + $0x14] sm:$0xf]
        %v525 = vld [vmem:[%s518 + $0x18] sm:$0xf]
        %v526 = vld [vmem:[%s518 + $0x1c] sm:$0xf]
        %v527 = vld [vmem:[%s518 + $0x20] sm:$0xf]
        %v528 = vld [vmem:[%s518 + $0x24] sm:$0xf]
        %v529 = vld [vmem:[%s518 + $0x28] sm:$0xf]
        %v530 = vld [vmem:[%s518 + $0x2c] sm:$0xf]
        %v531 = vld [vmem:[%s518 + $0x30] sm:$0xf]
        %v532 = vld [vmem:[%s518 + $0x34] sm:$0xf]
        %v533 = vld [vmem:[%s518 + $0x38] sm:$0xf]
        %v534 = vld [vmem:[%s518 + $0x3c] sm:$0xf]
        %v536 = vshrl.u32 %v492, 16
        %v538 = vshll.u32 %v492, 16
        %v540 = vrot.slane %v538, 1
        %v541 = vor.u32 %v536, %v540
        %v543 = vshll.u32 %v493, 16
        %v545 = vrot.slane %v543, 1
        %v546 = vsel %vm487, %v541, %v545
        %v547 = vshrl.u32 %v493, 16
        %v549 = vor.u32 %v547, %v545
        %v551 = vshll.u32 %v494, 16
        %v553 = vrot.slane %v551, 1
        %v554 = vsel %vm487, %v549, %v553
        %v555 = vshrl.u32 %v494, 16
        %v557 = vor.u32 %v555, %v553
        %v559 = vshll.u32 %v495, 16
        %v561 = vrot.slane %v559, 1
        %v562 = vsel %vm487, %v557, %v561
        %v563 = vshrl.u32 %v495, 16
        %v565 = vor.u32 %v563, %v561
        %v567 = vshll.u32 %v496, 16
        %v569 = vrot.slane %v567, 1
        %v570 = vsel %vm487, %v565, %v569
        %v571 = vshrl.u32 %v496, 16
        %v573 = vor.u32 %v571, %v569
        %v575 = vshll.u32 %v497, 16
        %v577 = vrot.slane %v575, 1
        %v578 = vsel %vm487, %v573, %v577
        %v579 = vshrl.u32 %v497, 16
        %v581 = vor.u32 %v579, %v577
        %v583 = vshll.u32 %v498, 16
        %v585 = vrot.slane %v583, 1
        %v586 = vsel %vm487, %v581, %v585
        %v587 = vshrl.u32 %v498, 16
        %v589 = vor.u32 %v587, %v585
        %v591 = vshll.u32 %v499, 16
        %v593 = vrot.slane %v591, 1
        %v594 = vsel %vm487, %v589, %v593
        %v595 = vshrl.u32 %v499, 16
        %v597 = vor.u32 %v595, %v593
        %v599 = vshll.u32 %v517, 16
        %v601 = vrot.slane %v599, 1
        %v602 = vsel %vm487, %v597, %v601
        %v603 = vshrl.u32 %v517, 16
        %v605 = vor.u32 %v603, %v601
        %v631 = vunpack.c.l.b16 %v519
        %v632 = vunpack.c.l.b16 %v520
        %v633 = vunpack.c.l.b16 %v521
        %v634 = vunpack.c.l.b16 %v522
        %v635 = vunpack.c.l.b16 %v523
        %v636 = vunpack.c.l.b16 %v524
        %v637 = vunpack.c.l.b16 %v525
        %v638 = vunpack.c.l.b16 %v526
        %v639 = vunpack.c.l.b16 %v527
        %v640 = vunpack.c.l.b16 %v528
        %v641 = vunpack.c.l.b16 %v529
        %v642 = vunpack.c.l.b16 %v530
        %v643 = vunpack.c.l.b16 %v531
        %v644 = vunpack.c.l.b16 %v532
        %v645 = vunpack.c.l.b16 %v533
        %v646 = vunpack.c.l.b16 %v534
        %v647 = vpack.c.b16 %v632, %v631
        %v648 = vpack.c.b16 %v634, %v633
        %v649 = vpack.c.b16 %v636, %v635
        %v650 = vpack.c.b16 %v638, %v637
        %v651 = vpack.c.b16 %v640, %v639
        %v652 = vpack.c.b16 %v642, %v641
        %v653 = vpack.c.b16 %v644, %v643
        %v654 = vpack.c.b16 %v646, %v645
        %663 = vmatprep.subr.bf16.mxu0 0
        %664 = vmatpush1.bf16.msra.mxu0 %v647
        %665 = vmatprep.subr.bf16.mxu0 0
        %666 = vmatpush1.bf16.msra.mxu0 %v648
        %667 = vmatprep.subr.bf16.mxu0 0
        %668 = vmatpush1.bf16.msra.mxu0 %v649
        %669 = vmatprep.subr.bf16.mxu0 0
        %670 = vmatpush1.bf16.msra.mxu0 %v650
        %671 = vmatprep.subr.bf16.mxu0 0
        %672 = vmatpush1.bf16.msra.mxu0 %v651
        %673 = vmatprep.subr.bf16.mxu0 0
        %674 = vmatpush1.bf16.msra.mxu0 %v652
        %675 = vmatprep.subr.bf16.mxu0 0
        %676 = vmatpush1.bf16.msra.mxu0 %v653
        %677 = vmatprep.subr.bf16.mxu0 0
        %678 = vmatpush1.bf16.msra.mxu0 %v654
        %679 = vmatprep.subr.bf16.mxu0 0
        %680 = vmatpush1.bf16.msra.mxu0 0
        %681 = vmatprep.subr.bf16.mxu0 0
        %682 = vmatpush1.bf16.msra.mxu0 0
        %683 = vmatprep.subr.bf16.mxu0 0
        %684 = vmatpush1.bf16.msra.mxu0 0
        %685 = vmatprep.subr.bf16.mxu0 0
        %686 = vmatpush1.bf16.msra.mxu0 0
        %687 = vmatprep.subr.bf16.mxu0 0
        %688 = vmatpush1.bf16.msra.mxu0 0
        %689 = vmatprep.subr.bf16.mxu0 0
        %690 = vmatpush1.bf16.msra.mxu0 0
        %691 = vmatprep.subr.bf16.mxu0 0
        %692 = vmatpush1.bf16.msra.mxu0 0
        %693 = vmatprep.subr.bf16.mxu0 0
        %694 = vmatpush1.bf16.msra.mxu0 0
        %695 = vmatprep.mubr.bf16.mxu0 0
        %696 = vmatmul.mubr.bf16.gmra.mrb[0].mxu0 %v546
        %v697 = vpop.f32.mrb[0].mxu0
        %v698 = vadd.f32 0.0, %v697
        %v699 = vpop.f32.mrb[0].mxu0
        %v700 = vpop.f32.mrb[0].mxu0
        %v701 = vadd.f32 0.0, %v700
        %v702 = vpop.f32.mrb[0].mxu0
        %703 = vmatprep.mubr.bf16.mxu0 0
        %704 = vmatmul.mubr.bf16.gmra.mrb[0].mxu0 %v554
        %v705 = vpop.f32.mrb[0].mxu0
        %v706 = vadd.f32 0.0, %v705
        %v707 = vpop.f32.mrb[0].mxu0
        %v708 = vpop.f32.mrb[0].mxu0
        %v709 = vadd.f32 0.0, %v708
        %v710 = vpop.f32.mrb[0].mxu0
        %711 = vmatprep.mubr.bf16.mxu0 0
        %712 = vmatmul.mubr.bf16.gmra.mrb[0].mxu0 %v562
        %v713 = vpop.f32.mrb[0].mxu0
        %v714 = vadd.f32 0.0, %v713
        %v715 = vpop.f32.mrb[0].mxu0
        %v716 = vpop.f32.mrb[0].mxu0
        %v717 = vadd.f32 0.0, %v716
        %v718 = vpop.f32.mrb[0].mxu0
        %719 = vmatprep.mubr.bf16.mxu0 0
        %720 = vmatmul.mubr.bf16.gmra.mrb[0].mxu0 %v570
        %v721 = vpop.f32.mrb[0].mxu0
        %v722 = vadd.f32 0.0, %v721
        %v723 = vpop.f32.mrb[0].mxu0
        %v724 = vpop.f32.mrb[0].mxu0
        %v725 = vadd.f32 0.0, %v724
        %v726 = vpop.f32.mrb[0].mxu0
        %727 = vmatprep.mubr.bf16.mxu0 0
        %728 = vmatmul.mubr.bf16.gmra.mrb[0].mxu0 %v578
        %v729 = vpop.f32.mrb[0].mxu0
        %v730 = vadd.f32 0.0, %v729
        %v731 = vpop.f32.mrb[0].mxu0
        %v732 = vpop.f32.mrb[0].mxu0
        %v733 = vadd.f32 0.0, %v732
        %v734 = vpop.f32.mrb[0].mxu0
        %735 = vmatprep.mubr.bf16.mxu0 0
        %736 = vmatmul.mubr.bf16.gmra.mrb[0].mxu0 %v586
        %v737 = vpop.f32.mrb[0].mxu0
        %v738 = vadd.f32 0.0, %v737
        %v739 = vpop.f32.mrb[0].mxu0
        %v740 = vpop.f32.mrb[0].mxu0
        %v741 = vadd.f32 0.0, %v740
        %v742 = vpop.f32.mrb[0].mxu0
        %743 = vmatprep.mubr.bf16.mxu0 0
        %744 = vmatmul.mubr.bf16.gmra.mrb[0].mxu0 %v594
        %v745 = vpop.f32.mrb[0].mxu0
        %v746 = vadd.f32 0.0, %v745
        %v747 = vpop.f32.mrb[0].mxu0
        %v748 = vpop.f32.mrb[0].mxu0
        %v749 = vadd.f32 0.0, %v748
        %v750 = vpop.f32.mrb[0].mxu0
        %751 = vmatprep.mubr.bf16.mxu0 0
        %752 = vmatmul.mubr.bf16.gmra.mrb[0].mxu0 %v602
        %v753 = vpop.f32.mrb[0].mxu0
        %v754 = vadd.f32 0.0, %v753
        %v755 = vpop.f32.mrb[0].mxu0
        %v756 = vpop.f32.mrb[0].mxu0
        %v757 = vadd.f32 0.0, %v756
        %v758 = vpop.f32.mrb[0].mxu0
        %759 = vmatprep.mubr.bf16.mxu0 0
        %760 = vmatmul.mubr.bf16.gmra.mrb[0].mxu0 %v605
        %v761 = vpop.f32.mrb[0].mxu0
        %v762 = vadd.f32 0.0, %v761
        %v763 = vpop.f32.mrb[0].mxu0
        %v764 = vpop.f32.mrb[0].mxu0
        %v765 = vadd.f32 0.0, %v764
        %v766 = vpop.f32.mrb[0].mxu0
        %767 = vdwg.mxu0
        %v784 = vunpack.c.l.b16 %v501
        %v785 = vunpack.c.l.b16 %v502
        %v786 = vunpack.c.l.b16 %v503
        %v787 = vunpack.c.l.b16 %v504
        %v788 = vunpack.c.l.b16 %v505
        %v789 = vunpack.c.l.b16 %v506
        %v790 = vunpack.c.l.b16 %v507
        %v791 = vunpack.c.l.b16 %v508
        %v792 = vunpack.c.l.b16 %v509
        %v793 = vunpack.c.l.b16 %v510
        %v794 = vunpack.c.l.b16 %v511
        %v795 = vunpack.c.l.b16 %v512
        %v796 = vunpack.c.l.b16 %v513
        %v797 = vunpack.c.l.b16 %v514
        %v798 = vunpack.c.l.b16 %v515
        %v799 = vunpack.c.l.b16 %v516
        %v800 = vpack.c.b16 %v785, %v784
        %v801 = vpack.c.b16 %v787, %v786
        %v802 = vpack.c.b16 %v789, %v788
        %v803 = vpack.c.b16 %v791, %v790
        %v804 = vpack.c.b16 %v793, %v792
        %v805 = vpack.c.b16 %v795, %v794
        %v806 = vpack.c.b16 %v797, %v796
        %v807 = vpack.c.b16 %v799, %v798
        %816 = vmatprep.subr.bf16.mxu0 0
        %817 = vmatpush1.bf16.msra.mxu0 %v800
        %818 = vmatprep.subr.bf16.mxu0 0
        %819 = vmatpush1.bf16.msra.mxu0 %v801
        %820 = vmatprep.subr.bf16.mxu0 0
        %821 = vmatpush1.bf16.msra.mxu0 %v802
        %822 = vmatprep.subr.bf16.mxu0 0
        %823 = vmatpush1.bf16.msra.mxu0 %v803
        %824 = vmatprep.subr.bf16.mxu0 0
        %825 = vmatpush1.bf16.msra.mxu0 %v804
        %826 = vmatprep.subr.bf16.mxu0 0
        %827 = vmatpush1.bf16.msra.mxu0 %v805
        %828 = vmatprep.subr.bf16.mxu0 0
        %829 = vmatpush1.bf16.msra.mxu0 %v806
        %830 = vmatprep.subr.bf16.mxu0 0
        %831 = vmatpush1.bf16.msra.mxu0 %v807
        %832 = vmatprep.subr.bf16.mxu0 0
        %833 = vmatpush1.bf16.msra.mxu0 0
        %834 = vmatprep.subr.bf16.mxu0 0
        %835 = vmatpush1.bf16.msra.mxu0 0
        %836 = vmatprep.subr.bf16.mxu0 0
        %837 = vmatpush1.bf16.msra.mxu0 0
        %838 = vmatprep.subr.bf16.mxu0 0
        %839 = vmatpush1.bf16.msra.mxu0 0
        %840 = vmatprep.subr.bf16.mxu0 0
        %841 = vmatpush1.bf16.msra.mxu0 0
        %842 = vmatprep.subr.bf16.mxu0 0
        %843 = vmatpush1.bf16.msra.mxu0 0
        %844 = vmatprep.subr.bf16.mxu0 0
        %845 = vmatpush1.bf16.msra.mxu0 0
        %846 = vmatprep.subr.bf16.mxu0 0
        %847 = vmatpush1.bf16.msra.mxu0 0
        %848 = vmatprep.mubr.bf16.mxu0 0
        %849 = vmatmul.mubr.bf16.gmra.mrb[0].mxu0 %v492
        %v850 = vpop.f32.mrb[0].mxu0
        %v851 = vadd.f32 %v698, %v850
        %v852 = vpop.f32.mrb[0].mxu0
        %v853 = vpop.f32.mrb[0].mxu0
        %v854 = vadd.f32 %v701, %v853
        %v855 = vpop.f32.mrb[0].mxu0
        %856 = vmatprep.mubr.bf16.mxu0 0
        %857 = vmatmul.mubr.bf16.gmra.mrb[0].mxu0 %v493
        %v858 = vpop.f32.mrb[0].mxu0
        %v859 = vadd.f32 %v706, %v858
        %v860 = vpop.f32.mrb[0].mxu0
        %v861 = vpop.f32.mrb[0].mxu0
        %v862 = vadd.f32 %v709, %v861
        %v863 = vpop.f32.mrb[0].mxu0
        %864 = vmatprep.mubr.bf16.mxu0 0
        %865 = vmatmul.mubr.bf16.gmra.mrb[0].mxu0 %v494
        %v866 = vpop.f32.mrb[0].mxu0
        %v867 = vadd.f32 %v714, %v866
        %v868 = vpop.f32.mrb[0].mxu0
        %v869 = vpop.f32.mrb[0].mxu0
        %v870 = vadd.f32 %v717, %v869
        %v871 = vpop.f32.mrb[0].mxu0
        %872 = vmatprep.mubr.bf16.mxu0 0
        %873 = vmatmul.mubr.bf16.gmra.mrb[0].mxu0 %v495
        %v874 = vpop.f32.mrb[0].mxu0
        %v875 = vadd.f32 %v722, %v874
        %v876 = vpop.f32.mrb[0].mxu0
        %v877 = vpop.f32.mrb[0].mxu0
        %v878 = vadd.f32 %v725, %v877
        %v879 = vpop.f32.mrb[0].mxu0
        %880 = vmatprep.mubr.bf16.mxu0 0
        %881 = vmatmul.mubr.bf16.gmra.mrb[0].mxu0 %v496
        %v882 = vpop.f32.mrb[0].mxu0
        %v883 = vadd.f32 %v730, %v882
        %v884 = vpop.f32.mrb[0].mxu0
        %v885 = vpop.f32.mrb[0].mxu0
        %v886 = vadd.f32 %v733, %v885
        %v887 = vpop.f32.mrb[0].mxu0
        %888 = vmatprep.mubr.bf16.mxu0 0
        %889 = vmatmul.mubr.bf16.gmra.mrb[0].mxu0 %v497
        %v890 = vpop.f32.mrb[0].mxu0
        %v891 = vadd.f32 %v738, %v890
        %v892 = vpop.f32.mrb[0].mxu0
        %v893 = vpop.f32.mrb[0].mxu0
        %v894 = vadd.f32 %v741, %v893
        %v895 = vpop.f32.mrb[0].mxu0
        %896 = vmatprep.mubr.bf16.mxu0 0
        %897 = vmatmul.mubr.bf16.gmra.mrb[0].mxu0 %v498
        %v898 = vpop.f32.mrb[0].mxu0
        %v899 = vadd.f32 %v746, %v898
        %v900 = vpop.f32.mrb[0].mxu0
        %v901 = vpop.f32.mrb[0].mxu0
        %v902 = vadd.f32 %v749, %v901
        %v903 = vpop.f32.mrb[0].mxu0
        %904 = vmatprep.mubr.bf16.mxu0 0
        %905 = vmatmul.mubr.bf16.gmra.mrb[0].mxu0 %v499
        %v906 = vpop.f32.mrb[0].mxu0
        %v907 = vadd.f32 %v754, %v906
        %v908 = vpop.f32.mrb[0].mxu0
        %v909 = vpop.f32.mrb[0].mxu0
        %v910 = vadd.f32 %v757, %v909
        %v911 = vpop.f32.mrb[0].mxu0
        %912 = vmatprep.mubr.bf16.mxu0 0
        %913 = vmatmul.mubr.bf16.gmra.mrb[0].mxu0 %v500
        %v914 = vpop.f32.mrb[0].mxu0
        %v915 = vadd.f32 %v762, %v914
        %v916 = vpop.f32.mrb[0].mxu0
        %v917 = vpop.f32.mrb[0].mxu0
        %v918 = vadd.f32 %v765, %v917
        %v919 = vpop.f32.mrb[0].mxu0
        %920 = vdwg.mxu0
        %v921 = vld [vmem:[#allocation2] sm:$0xfe]
        %s922 = scalar_lea.vmem [#allocation6], 128
        %v923 = vld [vmem:[%s922] sm:$0xf]
        %v924 = vld [vmem:[%s922 + $0x4] sm:$0xf]
        %v925 = vld [vmem:[%s922 + $0x8] sm:$0xf]
        %v926 = vld [vmem:[%s922 + $0xc] sm:$0xf]
        %v927 = vld [vmem:[%s922 + $0x10] sm:$0xf]
        %v928 = vld [vmem:[%s922 + $0x14] sm:$0xf]
        %v929 = vld [vmem:[%s922 + $0x18] sm:$0xf]
        %v930 = vld [vmem:[%s922 + $0x1c] sm:$0xf]
        %v931 = vld [vmem:[%s922 + $0x20] sm:$0xf]
        %v932 = vld [vmem:[%s922 + $0x24] sm:$0xf]
        %v933 = vld [vmem:[%s922 + $0x28] sm:$0xf]
        %v934 = vld [vmem:[%s922 + $0x2c] sm:$0xf]
        %v935 = vld [vmem:[%s922 + $0x30] sm:$0xf]
        %v936 = vld [vmem:[%s922 + $0x34] sm:$0xf]
        %v937 = vld [vmem:[%s922 + $0x38] sm:$0xf]
        %v938 = vld [vmem:[%s922 + $0x3c] sm:$0xf]
        %v948 = vrot.slane %v921, 1
        %v949 = vrot.slane %v493, 1
        %v950 = vsel %vm458, %v948, %v949
        %v951 = vrot.slane %v494, 1
        %v952 = vsel %vm458, %v949, %v951
        %v953 = vrot.slane %v495, 1
        %v954 = vsel %vm458, %v951, %v953
        %v955 = vrot.slane %v496, 1
        %v956 = vsel %vm458, %v953, %v955
        %v957 = vrot.slane %v497, 1
        %v958 = vsel %vm458, %v955, %v957
        %v959 = vrot.slane %v498, 1
        %v960 = vsel %vm458, %v957, %v959
        %v961 = vrot.slane %v499, 1
        %v962 = vsel %vm458, %v959, %v961
        %v963 = vrot.slane %v517, 1
        %v964 = vsel %vm458, %v961, %v963
        %v990 = vunpack.c.l.b16 %v923
        %v991 = vunpack.c.l.b16 %v924
        %v992 = vunpack.c.l.b16 %v925
        %v993 = vunpack.c.l.b16 %v926
        %v994 = vunpack.c.l.b16 %v927
        %v995 = vunpack.c.l.b16 %v928
        %v996 = vunpack.c.l.b16 %v929
        %v997 = vunpack.c.l.b16 %v930
        %v998 = vunpack.c.l.b16 %v931
        %v999 = vunpack.c.l.b16 %v932
        %v1000 = vunpack.c.l.b16 %v933
        %v1001 = vunpack.c.l.b16 %v934
        %v1002 = vunpack.c.l.b16 %v935
        %v1003 = vunpack.c.l.b16 %v936
        %v1004 = vunpack.c.l.b16 %v937
        %v1005 = vunpack.c.l.b16 %v938
        %v1006 = vpack.c.b16 %v991, %v990
        %v1007 = vpack.c.b16 %v993, %v992
        %v1008 = vpack.c.b16 %v995, %v994
        %v1009 = vpack.c.b16 %v997, %v996
        %v1010 = vpack.c.b16 %v999, %v998
        %v1011 = vpack.c.b16 %v1001, %v1000
        %v1012 = vpack.c.b16 %v1003, %v1002
        %v1013 = vpack.c.b16 %v1005, %v1004
        %1022 = vmatprep.subr.bf16.mxu0 0
        %1023 = vmatpush1.bf16.msra.mxu0 %v1006
        %1024 = vmatprep.subr.bf16.mxu0 0
        %1025 = vmatpush1.bf16.msra.mxu0 %v1007
        %1026 = vmatprep.subr.bf16.mxu0 0
        %1027 = vmatpush1.bf16.msra.mxu0 %v1008
        %1028 = vmatprep.subr.bf16.mxu0 0
        %1029 = vmatpush1.bf16.msra.mxu0 %v1009
        %1030 = vmatprep.subr.bf16.mxu0 0
        %1031 = vmatpush1.bf16.msra.mxu0 %v1010
        %1032 = vmatprep.subr.bf16.mxu0 0
        %1033 = vmatpush1.bf16.msra.mxu0 %v1011
        %1034 = vmatprep.subr.bf16.mxu0 0
        %1035 = vmatpush1.bf16.msra.mxu0 %v1012
        %1036 = vmatprep.subr.bf16.mxu0 0
        %1037 = vmatpush1.bf16.msra.mxu0 %v1013
        %1038 = vmatprep.subr.bf16.mxu0 0
        %1039 = vmatpush1.bf16.msra.mxu0 0
        %1040 = vmatprep.subr.bf16.mxu0 0
        %1041 = vmatpush1.bf16.msra.mxu0 0
        %1042 = vmatprep.subr.bf16.mxu0 0
        %1043 = vmatpush1.bf16.msra.mxu0 0
        %1044 = vmatprep.subr.bf16.mxu0 0
        %1045 = vmatpush1.bf16.msra.mxu0 0
        %1046 = vmatprep.subr.bf16.mxu0 0
        %1047 = vmatpush1.bf16.msra.mxu0 0
        %1048 = vmatprep.subr.bf16.mxu0 0
        %1049 = vmatpush1.bf16.msra.mxu0 0
        %1050 = vmatprep.subr.bf16.mxu0 0
        %1051 = vmatpush1.bf16.msra.mxu0 0
        %1052 = vmatprep.subr.bf16.mxu0 0
        %1053 = vmatpush1.bf16.msra.mxu0 0
        %1054 = vmatprep.mubr.bf16.mxu0 0
        %1055 = vmatmul.mubr.bf16.gmra.mrb[0].mxu0 %v950
        %v1056 = vpop.f32.mrb[0].mxu0
        %v1057 = vadd.f32 0.0, %v1056
        %v1058 = vpop.f32.mrb[0].mxu0
        %v1059 = vpop.f32.mrb[0].mxu0
        %v1060 = vadd.f32 0.0, %v1059
        %v1061 = vpop.f32.mrb[0].mxu0
        %1062 = vmatprep.mubr.bf16.mxu0 0
        %1063 = vmatmul.mubr.bf16.gmra.mrb[0].mxu0 %v952
        %v1064 = vpop.f32.mrb[0].mxu0
        %v1065 = vadd.f32 0.0, %v1064
        %v1066 = vpop.f32.mrb[0].mxu0
        %v1067 = vpop.f32.mrb[0].mxu0
        %v1068 = vadd.f32 0.0, %v1067
        %v1069 = vpop.f32.mrb[0].mxu0
        %1070 = vmatprep.mubr.bf16.mxu0 0
        %1071 = vmatmul.mubr.bf16.gmra.mrb[0].mxu0 %v954
        %v1072 = vpop.f32.mrb[0].mxu0
        %v1073 = vadd.f32 0.0, %v1072
        %v1074 = vpop.f32.mrb[0].mxu0
        %v1075 = vpop.f32.mrb[0].mxu0
        %v1076 = vadd.f32 0.0, %v1075
        %v1077 = vpop.f32.mrb[0].mxu0
        %1078 = vmatprep.mubr.bf16.mxu0 0
        %1079 = vmatmul.mubr.bf16.gmra.mrb[0].mxu0 %v956
        %v1080 = vpop.f32.mrb[0].mxu0
        %v1081 = vadd.f32 0.0, %v1080
        %v1082 = vpop.f32.mrb[0].mxu0
        %v1083 = vpop.f32.mrb[0].mxu0
        %v1084 = vadd.f32 0.0, %v1083
        %v1085 = vpop.f32.mrb[0].mxu0
        %1086 = vmatprep.mubr.bf16.mxu0 0
        %1087 = vmatmul.mubr.bf16.gmra.mrb[0].mxu0 %v958
        %v1088 = vpop.f32.mrb[0].mxu0
        %v1089 = vadd.f32 0.0, %v1088
        %v1090 = vpop.f32.mrb[0].mxu0
        %v1091 = vpop.f32.mrb[0].mxu0
        %v1092 = vadd.f32 0.0, %v1091
        %v1093 = vpop.f32.mrb[0].mxu0
        %1094 = vmatprep.mubr.bf16.mxu0 0
        %1095 = vmatmul.mubr.bf16.gmra.mrb[0].mxu0 %v960
        %v1096 = vpop.f32.mrb[0].mxu0
        %v1097 = vadd.f32 0.0, %v1096
        %v1098 = vpop.f32.mrb[0].mxu0
        %v1099 = vpop.f32.mrb[0].mxu0
        %v1100 = vadd.f32 0.0, %v1099
        %v1101 = vpop.f32.mrb[0].mxu0
        %1102 = vmatprep.mubr.bf16.mxu0 0
        %1103 = vmatmul.mubr.bf16.gmra.mrb[0].mxu0 %v962
        %v1104 = vpop.f32.mrb[0].mxu0
        %v1105 = vadd.f32 0.0, %v1104
        %v1106 = vpop.f32.mrb[0].mxu0
        %v1107 = vpop.f32.mrb[0].mxu0
        %v1108 = vadd.f32 0.0, %v1107
        %v1109 = vpop.f32.mrb[0].mxu0
        %1110 = vmatprep.mubr.bf16.mxu0 0
        %1111 = vmatmul.mubr.bf16.gmra.mrb[0].mxu0 %v964
        %v1112 = vpop.f32.mrb[0].mxu0
        %v1113 = vadd.f32 0.0, %v1112
        %v1114 = vpop.f32.mrb[0].mxu0
        %v1115 = vpop.f32.mrb[0].mxu0
        %v1116 = vadd.f32 0.0, %v1115
        %v1117 = vpop.f32.mrb[0].mxu0
        %1118 = vmatprep.mubr.bf16.mxu0 0
        %1119 = vmatmul.mubr.bf16.gmra.mrb[0].mxu0 %v963
        %v1120 = vpop.f32.mrb[0].mxu0
        %v1121 = vadd.f32 0.0, %v1120
        %v1122 = vpop.f32.mrb[0].mxu0
        %v1123 = vpop.f32.mrb[0].mxu0
        %v1124 = vadd.f32 0.0, %v1123
        %v1125 = vpop.f32.mrb[0].mxu0
        %1126 = vdwg.mxu0
        %v1127 = vadd.f32 %v851, %v1057
        %v1128 = vadd.f32 %v854, %v1060
        %v1129 = vadd.f32 %v859, %v1065
        %v1130 = vadd.f32 %v862, %v1068
        %v1131 = vadd.f32 %v867, %v1073
        %v1132 = vadd.f32 %v870, %v1076
        %v1133 = vadd.f32 %v875, %v1081
        %v1134 = vadd.f32 %v878, %v1084
        %v1135 = vadd.f32 %v883, %v1089
        %v1136 = vadd.f32 %v886, %v1092
        %v1137 = vadd.f32 %v891, %v1097
        %v1138 = vadd.f32 %v894, %v1100
        %v1139 = vadd.f32 %v899, %v1105
        %v1140 = vadd.f32 %v902, %v1108
        %v1141 = vadd.f32 %v907, %v1113
        %v1142 = vadd.f32 %v910, %v1116
        %v1143 = vadd.f32 %v915, %v1121
        %v1144 = vadd.f32 %v918, %v1124
        %v1145 = vlaneseq
        %v1146 = vshrl.u32 %v1145, 7
        %v1147 = vsub.s32 0, %v1146
        %v1148 = vrot.slane %v249, %v1147
        %v1149 = vmul.f32 %v1127, %v1148
        %v1150 = vmul.f32 %v1128, %v1148
        %v1151 = vmul.f32 %v1129, %v1148
        %v1152 = vmul.f32 %v1130, %v1148
        %v1153 = vmul.f32 %v1131, %v1148
        %v1154 = vmul.f32 %v1132, %v1148
        %v1155 = vmul.f32 %v1133, %v1148
        %v1156 = vmul.f32 %v1134, %v1148
        %v1157 = vmul.f32 %v1135, %v1148
        %v1158 = vmul.f32 %v1136, %v1148
        %v1159 = vmul.f32 %v1137, %v1148
        %v1160 = vmul.f32 %v1138, %v1148
        %v1161 = vmul.f32 %v1139, %v1148
        %v1162 = vmul.f32 %v1140, %v1148
        %v1163 = vmul.f32 %v1141, %v1148
        %v1164 = vmul.f32 %v1142, %v1148
        %v1165 = vmul.f32 %v1143, %v1148
        %v1166 = vmul.f32 %v1144, %v1148
        %v1167 = vlaneseq
        %v1168 = vshrl.u32 %v1167, 7
        %v1169 = vsub.s32 0, %v1168
        %v1170 = vrot.slane %v250, %v1169
        %v1171 = vadd.f32 %v1149, %v1170
        %v1172 = vadd.f32 %v1150, %v1170
        %v1173 = vadd.f32 %v1151, %v1170
        %v1174 = vadd.f32 %v1152, %v1170
        %v1175 = vadd.f32 %v1153, %v1170
        %v1176 = vadd.f32 %v1154, %v1170
        %v1177 = vadd.f32 %v1155, %v1170
        %v1178 = vadd.f32 %v1156, %v1170
        %v1179 = vadd.f32 %v1157, %v1170
        %v1180 = vadd.f32 %v1158, %v1170
        %v1181 = vadd.f32 %v1159, %v1170
        %v1182 = vadd.f32 %v1160, %v1170
        %v1183 = vadd.f32 %v1161, %v1170
        %v1184 = vadd.f32 %v1162, %v1170
        %v1185 = vadd.f32 %v1163, %v1170
        %v1186 = vadd.f32 %v1164, %v1170
        %v1187 = vadd.f32 %v1165, %v1170
        %v1188 = vadd.f32 %v1166, %v1170
        %v1189 = vmax.f32 %v1171, 0.0
        %v1190 = vmax.f32 %v1172, 0.0
        %v1191 = vmax.f32 %v1173, 0.0
        %v1192 = vmax.f32 %v1174, 0.0
        %v1193 = vmax.f32 %v1175, 0.0
        %v1194 = vmax.f32 %v1176, 0.0
        %v1195 = vmax.f32 %v1177, 0.0
        %v1196 = vmax.f32 %v1178, 0.0
        %v1197 = vmax.f32 %v1179, 0.0
        %v1198 = vmax.f32 %v1180, 0.0
        %v1199 = vmax.f32 %v1181, 0.0
        %v1200 = vmax.f32 %v1182, 0.0
        %v1201 = vmax.f32 %v1183, 0.0
        %v1202 = vmax.f32 %v1184, 0.0
        %v1203 = vmax.f32 %v1185, 0.0
        %v1204 = vmax.f32 %v1186, 0.0
        %v1205 = vmax.f32 %v1187, 0.0
        %v1206 = vmax.f32 %v1188, 0.0
        %v1207 = vpack.c.bf16 %v1190, %v1189
        %v1209 = vshrl.u32 %v1207, 16
        %v1211 = vrot.slane %v1209, 7
        %v1212 = vshll.u32 %v1207, 16
        %v1214 = vor.u32 %v1211, %v1212
        %v1217 = vld [vmem:[#allocation2] sm:$0xff]
        %v1218 = vsel %vm280, %v1214, %v1217
        %1219 = vst [vmem:[#allocation2] sm:$0xff] %v1218
        %v1220 = vld [vmem:[#allocation2 + $0x8] sm:$0x1]
        %v1221 = vsel %vm286, %v1211, %v1220
        %1222 = vst [vmem:[#allocation2 + $0x8] sm:$0x1] %v1221
        %v1223 = vpack.c.bf16 %v1192, %v1191
        %v1224 = vpack.c.bf16 %v1193, %v1193
        %v1226 = vshrl.u32 %v1223, 16
        %v1228 = vrot.slane %v1226, 7
        %v1229 = vshll.u32 %v1223, 16
        %v1231 = vor.u32 %v1228, %v1229
        %v1233 = vshrl.u32 %v1224, 16
        %v1235 = vrot.slane %v1233, 7
        %v1236 = vshll.u32 %v1224, 16
        %v1238 = vor.u32 %v1235, %v1236
        %v1239 = vsel %vm285, %v1228, %v1238
        %v1242 = vld [vmem:[#allocation2 + $0x8] sm:$0xfe]
        %v1243 = vsel %vm309, %v1231, %v1242
        %1244 = vst [vmem:[#allocation2 + $0x8] sm:$0xfe] %v1243
        %v1245 = vld [vmem:[#allocation2 + $0x10] sm:$0x3]
        %v1246 = vsel %vm315, %v1239, %v1245
        %1247 = vst [vmem:[#allocation2 + $0x10] sm:$0x3] %v1246
        %v1248 = vpack.c.bf16 %v1194, %v1193
        %v1249 = vpack.c.bf16 %v1195, %v1195
        %v1251 = vshrl.u32 %v1248, 16
        %v1253 = vrot.slane %v1251, 7
        %v1254 = vshll.u32 %v1248, 16
        %v1256 = vor.u32 %v1253, %v1254
        %v1258 = vshrl.u32 %v1249, 16
        %v1260 = vrot.slane %v1258, 7
        %v1261 = vshll.u32 %v1249, 16
        %v1263 = vor.u32 %v1260, %v1261
        %v1264 = vsel %vm285, %v1253, %v1263
        %v1267 = vld [vmem:[#allocation2 + $0x10] sm:$0xfc]
        %v1268 = vsel %vm338, %v1256, %v1267
        %1269 = vst [vmem:[#allocation2 + $0x10] sm:$0xfc] %v1268
        %v1270 = vld [vmem:[#allocation2 + $0x18] sm:$0x7]
        %v1271 = vsel %vm344, %v1264, %v1270
        %1272 = vst [vmem:[#allocation2 + $0x18] sm:$0x7] %v1271
        %v1273 = vpack.c.bf16 %v1196, %v1195
        %v1274 = vpack.c.bf16 %v1197, %v1197
        %v1276 = vshrl.u32 %v1273, 16
        %v1278 = vrot.slane %v1276, 7
        %v1279 = vshll.u32 %v1273, 16
        %v1281 = vor.u32 %v1278, %v1279
        %v1283 = vshrl.u32 %v1274, 16
        %v1285 = vrot.slane %v1283, 7
        %v1286 = vshll.u32 %v1274, 16
        %v1288 = vor.u32 %v1285, %v1286
        %v1289 = vsel %vm285, %v1278, %v1288
        %v1292 = vld [vmem:[#allocation2 + $0x18] sm:$0xf8]
        %v1293 = vsel %vm367, %v1281, %v1292
        %1294 = vst [vmem:[#allocation2 + $0x18] sm:$0xf8] %v1293
        %v1295 = vld [vmem:[#allocation2 + $0x20] sm:$0xf]
        %v1296 = vsel %vm373, %v1289, %v1295
        %1297 = vst [vmem:[#allocation2 + $0x20] sm:$0xf] %v1296
        %v1298 = vpack.c.bf16 %v1199, %v1198
        %v1300 = vshrl.u32 %v1298, 16
        %v1302 = vrot.slane %v1300, 3
        %v1303 = vshll.u32 %v1298, 16
        %v1305 = vrot.slane %v1303, 4
        %v1306 = vor.u32 %v1302, %v1305
        %v1308 = vld [vmem:[#allocation2 + $0x20] sm:$0xf0]
        %v1309 = vsel %vm396, %v1306, %v1308
        %1310 = vst [vmem:[#allocation2 + $0x20] sm:$0xf0] %v1309
        %v1311 = vld [vmem:[#allocation2 + $0x28] sm:$0x1f]
        %v1312 = vsel %vm402, %v1306, %v1311
        %1313 = vst [vmem:[#allocation2 + $0x28] sm:$0x1f] %v1312
        %v1314 = vpack.c.bf16 %v1201, %v1200
        %v1315 = vpack.c.bf16 %v1202, %v1202
        %v1317 = vshrl.u32 %v1314, 16
        %v1319 = vrot.slane %v1317, 3
        %v1320 = vshll.u32 %v1314, 16
        %v1322 = vrot.slane %v1320, 4
        %v1323 = vor.u32 %v1319, %v1322
        %v1325 = vshrl.u32 %v1315, 16
        %v1327 = vrot.slane %v1325, 3
        %v1328 = vshll.u32 %v1315, 16
        %v1330 = vrot.slane %v1328, 4
        %v1331 = vor.u32 %v1327, %v1330
        %v1332 = vsel %vm401, %v1323, %v1331
        %v1335 = vld [vmem:[#allocation2 + $0x28] sm:$0xe0]
        %v1336 = vsel %vm425, %v1323, %v1335
        %1337 = vst [vmem:[#allocation2 + $0x28] sm:$0xe0] %v1336
        %v1338 = vld [vmem:[#allocation2 + $0x30] sm:$0x3f]
        %v1339 = vsel %vm431, %v1332, %v1338
        %1340 = vst [vmem:[#allocation2 + $0x30] sm:$0x3f] %v1339
        %v1341 = vpack.c.bf16 %v1203, %v1202
        %v1342 = vpack.c.bf16 %v1204, %v1204
        %v1344 = vshrl.u32 %v1341, 16
        %v1346 = vrot.slane %v1344, 3
        %v1347 = vshll.u32 %v1341, 16
        %v1349 = vrot.slane %v1347, 4
        %v1350 = vor.u32 %v1346, %v1349
        %v1352 = vshrl.u32 %v1342, 16
        %v1354 = vrot.slane %v1352, 3
        %v1355 = vshll.u32 %v1342, 16
        %v1357 = vrot.slane %v1355, 4
        %v1358 = vor.u32 %v1354, %v1357
        %v1359 = vsel %vm401, %v1350, %v1358
        %v1362 = vld [vmem:[#allocation2 + $0x30] sm:$0xc0]
        %v1363 = vsel %vm454, %v1350, %v1362
        %1364 = vst [vmem:[#allocation2 + $0x30] sm:$0xc0] %v1363
        %v1365 = vld [vmem:[#allocation2 + $0x38] sm:$0x7f]
        %v1366 = vsel %vm460, %v1359, %v1365
        %1367 = vst [vmem:[#allocation2 + $0x38] sm:$0x7f] %v1366
        %v1368 = vpack.c.bf16 %v1205, %v1204
        %v1369 = vpack.c.bf16 %v1206, %v1206
        %v1371 = vshll.u32 %v1368, 16
        %v1373 = vrot.slane %v1371, 4
        %v1374 = vshrl.u32 %v1368, 16
        %v1376 = vrot.slane %v1374, 3
        %v1377 = vor.u32 %v1376, %v1373
        %v1379 = vshrl.u32 %v1369, 16
        %v1381 = vrot.slane %v1379, 3
        %v1382 = vshll.u32 %v1369, 16
        %v1384 = vrot.slane %v1382, 4
        %v1385 = vor.u32 %v1381, %v1384
        %v1386 = vsel %vm401, %v1377, %v1385
        %v1389 = vld [vmem:[#allocation2 + $0x38] sm:$0x80]
        %v1390 = vsel %vm483, %v1373, %v1389
        %1391 = vst [vmem:[#allocation2 + $0x38] sm:$0x80] %v1390
        %v1392 = vld [vmem:[#allocation2 + $0x40] sm:$0xff]
        %v1393 = vsel %vm488, %v1386, %v1392
        %1394 = vst [vmem:[#allocation2 + $0x40] sm:$0xff] %v1393
        %v1395 = vld [vmem:[#allocation2] sm:$0xff]
        %v1396 = vld [vmem:[#allocation2 + $0x8] sm:$0xff]
        %v1397 = vld [vmem:[#allocation2 + $0x10] sm:$0xff]
        %v1398 = vld [vmem:[#allocation2 + $0x18] sm:$0xff]
        %v1399 = vld [vmem:[#allocation2 + $0x20] sm:$0xff]
        %v1400 = vld [vmem:[#allocation2 + $0x28] sm:$0xff]
        %v1401 = vld [vmem:[#allocation2 + $0x30] sm:$0xff]
        %v1402 = vld [vmem:[#allocation2 + $0x38] sm:$0xff]
        %v1403 = vld [vmem:[#allocation2 + $0x40] sm:$0x7f]
        %v1404 = vld [vmem:[#allocation8] sm:$0xf]
        %v1405 = vld [vmem:[#allocation8 + $0x4] sm:$0xf]
        %v1406 = vld [vmem:[#allocation8 + $0x8] sm:$0xf]
        %v1407 = vld [vmem:[#allocation8 + $0xc] sm:$0xf]
        %v1408 = vld [vmem:[#allocation8 + $0x10] sm:$0xf]
        %v1409 = vld [vmem:[#allocation8 + $0x14] sm:$0xf]
        %v1410 = vld [vmem:[#allocation8 + $0x18] sm:$0xf]
        %v1411 = vld [vmem:[#allocation8 + $0x1c] sm:$0xf]
        %v1412 = vld [vmem:[#allocation8 + $0x20] sm:$0xf]
        %v1413 = vld [vmem:[#allocation8 + $0x24] sm:$0xf]
        %v1414 = vld [vmem:[#allocation8 + $0x28] sm:$0xf]
        %v1415 = vld [vmem:[#allocation8 + $0x2c] sm:$0xf]
        %v1416 = vld [vmem:[#allocation8 + $0x30] sm:$0xf]
        %v1417 = vld [vmem:[#allocation8 + $0x34] sm:$0xf]
        %v1418 = vld [vmem:[#allocation8 + $0x38] sm:$0xf]
        %v1419 = vld [vmem:[#allocation8 + $0x3c] sm:$0xf]
        %v1420 = vld [vmem:[#allocation2 + $0x40] sm:$0xff]
        %s1421 = scalar_lea.vmem [#allocation8], 64
        %v1422 = vld [vmem:[%s1421] sm:$0xf]
        %v1423 = vld [vmem:[%s1421 + $0x4] sm:$0xf]
        %v1424 = vld [vmem:[%s1421 + $0x8] sm:$0xf]
        %v1425 = vld [vmem:[%s1421 + $0xc] sm:$0xf]
        %v1426 = vld [vmem:[%s1421 + $0x10] sm:$0xf]
        %v1427 = vld [vmem:[%s1421 + $0x14] sm:$0xf]
        %v1428 = vld [vmem:[%s1421 + $0x18] sm:$0xf]
        %v1429 = vld [vmem:[%s1421 + $0x1c] sm:$0xf]
        %v1430 = vld [vmem:[%s1421 + $0x20] sm:$0xf]
        %v1431 = vld [vmem:[%s1421 + $0x24] sm:$0xf]
        %v1432 = vld [vmem:[%s1421 + $0x28] sm:$0xf]
        %v1433 = vld [vmem:[%s1421 + $0x2c] sm:$0xf]
        %v1434 = vld [vmem:[%s1421 + $0x30] sm:$0xf]
        %v1435 = vld [vmem:[%s1421 + $0x34] sm:$0xf]
        %v1436 = vld [vmem:[%s1421 + $0x38] sm:$0xf]
        %v1437 = vld [vmem:[%s1421 + $0x3c] sm:$0xf]
        %v1439 = vshrl.u32 %v1395, 16
        %v1441 = vshll.u32 %v1395, 16
        %v1443 = vrot.slane %v1441, 1
        %v1444 = vor.u32 %v1439, %v1443
        %v1446 = vshll.u32 %v1396, 16
        %v1448 = vrot.slane %v1446, 1
        %v1449 = vsel %vm487, %v1444, %v1448
        %v1450 = vshrl.u32 %v1396, 16
        %v1452 = vor.u32 %v1450, %v1448
        %v1454 = vshll.u32 %v1397, 16
        %v1456 = vrot.slane %v1454, 1
        %v1457 = vsel %vm487, %v1452, %v1456
        %v1458 = vshrl.u32 %v1397, 16
        %v1460 = vor.u32 %v1458, %v1456
        %v1462 = vshll.u32 %v1398, 16
        %v1464 = vrot.slane %v1462, 1
        %v1465 = vsel %vm487, %v1460, %v1464
        %v1466 = vshrl.u32 %v1398, 16
        %v1468 = vor.u32 %v1466, %v1464
        %v1470 = vshll.u32 %v1399, 16
        %v1472 = vrot.slane %v1470, 1
        %v1473 = vsel %vm487, %v1468, %v1472
        %v1474 = vshrl.u32 %v1399, 16
        %v1476 = vor.u32 %v1474, %v1472
        %v1478 = vshll.u32 %v1400, 16
        %v1480 = vrot.slane %v1478, 1
        %v1481 = vsel %vm487, %v1476, %v1480
        %v1482 = vshrl.u32 %v1400, 16
        %v1484 = vor.u32 %v1482, %v1480
        %v1486 = vshll.u32 %v1401, 16
        %v1488 = vrot.slane %v1486, 1
        %v1489 = vsel %vm487, %v1484, %v1488
        %v1490 = vshrl.u32 %v1401, 16
        %v1492 = vor.u32 %v1490, %v1488
        %v1494 = vshll.u32 %v1402, 16
        %v1496 = vrot.slane %v1494, 1
        %v1497 = vsel %vm487, %v1492, %v1496
        %v1498 = vshrl.u32 %v1402, 16
        %v1500 = vor.u32 %v1498, %v1496
        %v1502 = vshll.u32 %v1420, 16
        %v1504 = vrot.slane %v1502, 1
        %v1505 = vsel %vm487, %v1500, %v1504
        %v1506 = vshrl.u32 %v1420, 16
        %v1508 = vor.u32 %v1506, %v1504
        %v1534 = vunpack.c.l.b16 %v1422
        %v1535 = vunpack.c.l.b16 %v1423
        %v1536 = vunpack.c.l.b16 %v1424
        %v1537 = vunpack.c.l.b16 %v1425
        %v1538 = vunpack.c.l.b16 %v1426
        %v1539 = vunpack.c.l.b16 %v1427
        %v1540 = vunpack.c.l.b16 %v1428
        %v1541 = vunpack.c.l.b16 %v1429
        %v1542 = vunpack.c.l.b16 %v1430
        %v1543 = vunpack.c.l.b16 %v1431
        %v1544 = vunpack.c.l.b16 %v1432
        %v1545 = vunpack.c.l.b16 %v1433
        %v1546 = vunpack.c.l.b16 %v1434
        %v1547 = vunpack.c.l.b16 %v1435
        %v1548 = vunpack.c.l.b16 %v1436
        %v1549 = vunpack.c.l.b16 %v1437
        %v1550 = vpack.c.b16 %v1535, %v1534
        %v1551 = vpack.c.b16 %v1537, %v1536
        %v1552 = vpack.c.b16 %v1539, %v1538
        %v1553 = vpack.c.b16 %v1541, %v1540
        %v1554 = vpack.c.b16 %v1543, %v1542
        %v1555 = vpack.c.b16 %v1545, %v1544
        %v1556 = vpack.c.b16 %v1547, %v1546
        %v1557 = vpack.c.b16 %v1549, %v1548
        %1566 = vmatprep.subr.bf16.mxu0 0
        %1567 = vmatpush1.bf16.msra.mxu0 %v1550
        %1568 = vmatprep.subr.bf16.mxu0 0
        %1569 = vmatpush1.bf16.msra.mxu0 %v1551
        %1570 = vmatprep.subr.bf16.mxu0 0
        %1571 = vmatpush1.bf16.msra.mxu0 %v1552
        %1572 = vmatprep.subr.bf16.mxu0 0
        %1573 = vmatpush1.bf16.msra.mxu0 %v1553
        %1574 = vmatprep.subr.bf16.mxu0 0
        %1575 = vmatpush1.bf16.msra.mxu0 %v1554
        %1576 = vmatprep.subr.bf16.mxu0 0
        %1577 = vmatpush1.bf16.msra.mxu0 %v1555
        %1578 = vmatprep.subr.bf16.mxu0 0
        %1579 = vmatpush1.bf16.msra.mxu0 %v1556
        %1580 = vmatprep.subr.bf16.mxu0 0
        %1581 = vmatpush1.bf16.msra.mxu0 %v1557
        %1582 = vmatprep.subr.bf16.mxu0 0
        %1583 = vmatpush1.bf16.msra.mxu0 0
        %1584 = vmatprep.subr.bf16.mxu0 0
        %1585 = vmatpush1.bf16.msra.mxu0 0
        %1586 = vmatprep.subr.bf16.mxu0 0
        %1587 = vmatpush1.bf16.msra.mxu0 0
        %1588 = vmatprep.subr.bf16.mxu0 0
        %1589 = vmatpush1.bf16.msra.mxu0 0
        %1590 = vmatprep.subr.bf16.mxu0 0
        %1591 = vmatpush1.bf16.msra.mxu0 0
        %1592 = vmatprep.subr.bf16.mxu0 0
        %1593 = vmatpush1.bf16.msra.mxu0 0
        %1594 = vmatprep.subr.bf16.mxu0 0
        %1595 = vmatpush1.bf16.msra.mxu0 0
        %1596 = vmatprep.subr.bf16.mxu0 0
        %1597 = vmatpush1.bf16.msra.mxu0 0
        %1598 = vmatprep.mubr.bf16.mxu0 0
        %1599 = vmatmul.mubr.bf16.gmra.mrb[0].mxu0 %v1449
        %v1600 = vpop.f32.mrb[0].mxu0
        %v1601 = vadd.f32 0.0, %v1600
        %v1602 = vpop.f32.mrb[0].mxu0
        %v1603 = vpop.f32.mrb[0].mxu0
        %v1604 = vadd.f32 0.0, %v1603
        %v1605 = vpop.f32.mrb[0].mxu0
        %1606 = vmatprep.mubr.bf16.mxu0 0
        %1607 = vmatmul.mubr.bf16.gmra.mrb[0].mxu0 %v1457
        %v1608 = vpop.f32.mrb[0].mxu0
        %v1609 = vadd.f32 0.0, %v1608
        %v1610 = vpop.f32.mrb[0].mxu0
        %v1611 = vpop.f32.mrb[0].mxu0
        %v1612 = vadd.f32 0.0, %v1611
        %v1613 = vpop.f32.mrb[0].mxu0
        %1614 = vmatprep.mubr.bf16.mxu0 0
        %1615 = vmatmul.mubr.bf16.gmra.mrb[0].mxu0 %v1465
        %v1616 = vpop.f32.mrb[0].mxu0
        %v1617 = vadd.f32 0.0, %v1616
        %v1618 = vpop.f32.mrb[0].mxu0
        %v1619 = vpop.f32.mrb[0].mxu0
        %v1620 = vadd.f32 0.0, %v1619
        %v1621 = vpop.f32.mrb[0].mxu0
        %1622 = vmatprep.mubr.bf16.mxu0 0
        %1623 = vmatmul.mubr.bf16.gmra.mrb[0].mxu0 %v1473
        %v1624 = vpop.f32.mrb[0].mxu0
        %v1625 = vadd.f32 0.0, %v1624
        %v1626 = vpop.f32.mrb[0].mxu0
        %v1627 = vpop.f32.mrb[0].mxu0
        %v1628 = vadd.f32 0.0, %v1627
        %v1629 = vpop.f32.mrb[0].mxu0
        %1630 = vmatprep.mubr.bf16.mxu0 0
        %1631 = vmatmul.mubr.bf16.gmra.mrb[0].mxu0 %v1481
        %v1632 = vpop.f32.mrb[0].mxu0
        %v1633 = vadd.f32 0.0, %v1632
        %v1634 = vpop.f32.mrb[0].mxu0
        %v1635 = vpop.f32.mrb[0].mxu0
        %v1636 = vadd.f32 0.0, %v1635
        %v1637 = vpop.f32.mrb[0].mxu0
        %1638 = vmatprep.mubr.bf16.mxu0 0
        %1639 = vmatmul.mubr.bf16.gmra.mrb[0].mxu0 %v1489
        %v1640 = vpop.f32.mrb[0].mxu0
        %v1641 = vadd.f32 0.0, %v1640
        %v1642 = vpop.f32.mrb[0].mxu0
        %v1643 = vpop.f32.mrb[0].mxu0
        %v1644 = vadd.f32 0.0, %v1643
        %v1645 = vpop.f32.mrb[0].mxu0
        %1646 = vmatprep.mubr.bf16.mxu0 0
        %1647 = vmatmul.mubr.bf16.gmra.mrb[0].mxu0 %v1497
        %v1648 = vpop.f32.mrb[0].mxu0
        %v1649 = vadd.f32 0.0, %v1648
        %v1650 = vpop.f32.mrb[0].mxu0
        %v1651 = vpop.f32.mrb[0].mxu0
        %v1652 = vadd.f32 0.0, %v1651
        %v1653 = vpop.f32.mrb[0].mxu0
        %1654 = vmatprep.mubr.bf16.mxu0 0
        %1655 = vmatmul.mubr.bf16.gmra.mrb[0].mxu0 %v1505
        %v1656 = vpop.f32.mrb[0].mxu0
        %v1657 = vadd.f32 0.0, %v1656
        %v1658 = vpop.f32.mrb[0].mxu0
        %v1659 = vpop.f32.mrb[0].mxu0
        %v1660 = vadd.f32 0.0, %v1659
        %v1661 = vpop.f32.mrb[0].mxu0
        %1662 = vmatprep.mubr.bf16.mxu0 0
        %1663 = vmatmul.mubr.bf16.gmra.mrb[0].mxu0 %v1508
        %v1664 = vpop.f32.mrb[0].mxu0
        %v1665 = vadd.f32 0.0, %v1664
        %v1666 = vpop.f32.mrb[0].mxu0
        %v1667 = vpop.f32.mrb[0].mxu0
        %v1668 = vadd.f32 0.0, %v1667
        %v1669 = vpop.f32.mrb[0].mxu0
        %1670 = vdwg.mxu0
        %v1687 = vunpack.c.l.b16 %v1404
        %v1688 = vunpack.c.l.b16 %v1405
        %v1689 = vunpack.c.l.b16 %v1406
        %v1690 = vunpack.c.l.b16 %v1407
        %v1691 = vunpack.c.l.b16 %v1408
        %v1692 = vunpack.c.l.b16 %v1409
        %v1693 = vunpack.c.l.b16 %v1410
        %v1694 = vunpack.c.l.b16 %v1411
        %v1695 = vunpack.c.l.b16 %v1412
        %v1696 = vunpack.c.l.b16 %v1413
        %v1697 = vunpack.c.l.b16 %v1414
        %v1698 = vunpack.c.l.b16 %v1415
        %v1699 = vunpack.c.l.b16 %v1416
        %v1700 = vunpack.c.l.b16 %v1417
        %v1701 = vunpack.c.l.b16 %v1418
        %v1702 = vunpack.c.l.b16 %v1419
        %v1703 = vpack.c.b16 %v1688, %v1687
        %v1704 = vpack.c.b16 %v1690, %v1689
        %v1705 = vpack.c.b16 %v1692, %v1691
        %v1706 = vpack.c.b16 %v1694, %v1693
        %v1707 = vpack.c.b16 %v1696, %v1695
        %v1708 = vpack.c.b16 %v1698, %v1697
        %v1709 = vpack.c.b16 %v1700, %v1699
        %v1710 = vpack.c.b16 %v1702, %v1701
        %1719 = vmatprep.subr.bf16.mxu0 0
        %1720 = vmatpush1.bf16.msra.mxu0 %v1703
        %1721 = vmatprep.subr.bf16.mxu0 0
        %1722 = vmatpush1.bf16.msra.mxu0 %v1704
        %1723 = vmatprep.subr.bf16.mxu0 0
        %1724 = vmatpush1.bf16.msra.mxu0 %v1705
        %1725 = vmatprep.subr.bf16.mxu0 0
        %1726 = vmatpush1.bf16.msra.mxu0 %v1706
        %1727 = vmatprep.subr.bf16.mxu0 0
        %1728 = vmatpush1.bf16.msra.mxu0 %v1707
        %1729 = vmatprep.subr.bf16.mxu0 0
        %1730 = vmatpush1.bf16.msra.mxu0 %v1708
        %1731 = vmatprep.subr.bf16.mxu0 0
        %1732 = vmatpush1.bf16.msra.mxu0 %v1709
        %1733 = vmatprep.subr.bf16.mxu0 0
        %1734 = vmatpush1.bf16.msra.mxu0 %v1710
        %1735 = vmatprep.subr.bf16.mxu0 0
        %1736 = vmatpush1.bf16.msra.mxu0 0
        %1737 = vmatprep.subr.bf16.mxu0 0
        %1738 = vmatpush1.bf16.msra.mxu0 0
        %1739 = vmatprep.subr.bf16.mxu0 0
        %1740 = vmatpush1.bf16.msra.mxu0 0
        %1741 = vmatprep.subr.bf16.mxu0 0
        %1742 = vmatpush1.bf16.msra.mxu0 0
        %1743 = vmatprep.subr.bf16.mxu0 0
        %1744 = vmatpush1.bf16.msra.mxu0 0
        %1745 = vmatprep.subr.bf16.mxu0 0
        %1746 = vmatpush1.bf16.msra.mxu0 0
        %1747 = vmatprep.subr.bf16.mxu0 0
        %1748 = vmatpush1.bf16.msra.mxu0 0
        %1749 = vmatprep.subr.bf16.mxu0 0
        %1750 = vmatpush1.bf16.msra.mxu0 0
        %1751 = vmatprep.mubr.bf16.mxu0 0
        %1752 = vmatmul.mubr.bf16.gmra.mrb[0].mxu0 %v1395
        %v1753 = vpop.f32.mrb[0].mxu0
        %v1754 = vadd.f32 %v1601, %v1753
        %v1755 = vpop.f32.mrb[0].mxu0
        %v1756 = vpop.f32.mrb[0].mxu0
        %v1757 = vadd.f32 %v1604, %v1756
        %v1758 = vpop.f32.mrb[0].mxu0
        %1759 = vmatprep.mubr.bf16.mxu0 0
        %1760 = vmatmul.mubr.bf16.gmra.mrb[0].mxu0 %v1396
        %v1761 = vpop.f32.mrb[0].mxu0
        %v1762 = vadd.f32 %v1609, %v1761
        %v1763 = vpop.f32.mrb[0].mxu0
        %v1764 = vpop.f32.mrb[0].mxu0
        %v1765 = vadd.f32 %v1612, %v1764
        %v1766 = vpop.f32.mrb[0].mxu0
        %1767 = vmatprep.mubr.bf16.mxu0 0
        %1768 = vmatmul.mubr.bf16.gmra.mrb[0].mxu0 %v1397
        %v1769 = vpop.f32.mrb[0].mxu0
        %v1770 = vadd.f32 %v1617, %v1769
        %v1771 = vpop.f32.mrb[0].mxu0
        %v1772 = vpop.f32.mrb[0].mxu0
        %v1773 = vadd.f32 %v1620, %v1772
        %v1774 = vpop.f32.mrb[0].mxu0
        %1775 = vmatprep.mubr.bf16.mxu0 0
        %1776 = vmatmul.mubr.bf16.gmra.mrb[0].mxu0 %v1398
        %v1777 = vpop.f32.mrb[0].mxu0
        %v1778 = vadd.f32 %v1625, %v1777
        %v1779 = vpop.f32.mrb[0].mxu0
        %v1780 = vpop.f32.mrb[0].mxu0
        %v1781 = vadd.f32 %v1628, %v1780
        %v1782 = vpop.f32.mrb[0].mxu0
        %1783 = vmatprep.mubr.bf16.mxu0 0
        %1784 = vmatmul.mubr.bf16.gmra.mrb[0].mxu0 %v1399
        %v1785 = vpop.f32.mrb[0].mxu0
        %v1786 = vadd.f32 %v1633, %v1785
        %v1787 = vpop.f32.mrb[0].mxu0
        %v1788 = vpop.f32.mrb[0].mxu0
        %v1789 = vadd.f32 %v1636, %v1788
        %v1790 = vpop.f32.mrb[0].mxu0
        %1791 = vmatprep.mubr.bf16.mxu0 0
        %1792 = vmatmul.mubr.bf16.gmra.mrb[0].mxu0 %v1400
        %v1793 = vpop.f32.mrb[0].mxu0
        %v1794 = vadd.f32 %v1641, %v1793
        %v1795 = vpop.f32.mrb[0].mxu0
        %v1796 = vpop.f32.mrb[0].mxu0
        %v1797 = vadd.f32 %v1644, %v1796
        %v1798 = vpop.f32.mrb[0].mxu0
        %1799 = vmatprep.mubr.bf16.mxu0 0
        %1800 = vmatmul.mubr.bf16.gmra.mrb[0].mxu0 %v1401
        %v1801 = vpop.f32.mrb[0].mxu0
        %v1802 = vadd.f32 %v1649, %v1801
        %v1803 = vpop.f32.mrb[0].mxu0
        %v1804 = vpop.f32.mrb[0].mxu0
        %v1805 = vadd.f32 %v1652, %v1804
        %v1806 = vpop.f32.mrb[0].mxu0
        %1807 = vmatprep.mubr.bf16.mxu0 0
        %1808 = vmatmul.mubr.bf16.gmra.mrb[0].mxu0 %v1402
        %v1809 = vpop.f32.mrb[0].mxu0
        %v1810 = vadd.f32 %v1657, %v1809
        %v1811 = vpop.f32.mrb[0].mxu0
        %v1812 = vpop.f32.mrb[0].mxu0
        %v1813 = vadd.f32 %v1660, %v1812
        %v1814 = vpop.f32.mrb[0].mxu0
        %1815 = vmatprep.mubr.bf16.mxu0 0
        %1816 = vmatmul.mubr.bf16.gmra.mrb[0].mxu0 %v1403
        %v1817 = vpop.f32.mrb[0].mxu0
        %v1818 = vadd.f32 %v1665, %v1817
        %v1819 = vpop.f32.mrb[0].mxu0
        %v1820 = vpop.f32.mrb[0].mxu0
        %v1821 = vadd.f32 %v1668, %v1820
        %v1822 = vpop.f32.mrb[0].mxu0
        %1823 = vdwg.mxu0
        %v1824 = vld [vmem:[#allocation2] sm:$0xfe]
        %s1825 = scalar_lea.vmem [#allocation8], 128
        %v1826 = vld [vmem:[%s1825] sm:$0xf]
        %v1827 = vld [vmem:[%s1825 + $0x4] sm:$0xf]
        %v1828 = vld [vmem:[%s1825 + $0x8] sm:$0xf]
        %v1829 = vld [vmem:[%s1825 + $0xc] sm:$0xf]
        %v1830 = vld [vmem:[%s1825 + $0x10] sm:$0xf]
        %v1831 = vld [vmem:[%s1825 + $0x14] sm:$0xf]
        %v1832 = vld [vmem:[%s1825 + $0x18] sm:$0xf]
        %v1833 = vld [vmem:[%s1825 + $0x1c] sm:$0xf]
        %v1834 = vld [vmem:[%s1825 + $0x20] sm:$0xf]
        %v1835 = vld [vmem:[%s1825 + $0x24] sm:$0xf]
        %v1836 = vld [vmem:[%s1825 + $0x28] sm:$0xf]
        %v1837 = vld [vmem:[%s1825 + $0x2c] sm:$0xf]
        %v1838 = vld [vmem:[%s1825 + $0x30] sm:$0xf]
        %v1839 = vld [vmem:[%s1825 + $0x34] sm:$0xf]
        %v1840 = vld [vmem:[%s1825 + $0x38] sm:$0xf]
        %v1841 = vld [vmem:[%s1825 + $0x3c] sm:$0xf]
        %v1851 = vrot.slane %v1824, 1
        %v1852 = vrot.slane %v1396, 1
        %v1853 = vsel %vm458, %v1851, %v1852
        %v1854 = vrot.slane %v1397, 1
        %v1855 = vsel %vm458, %v1852, %v1854
        %v1856 = vrot.slane %v1398, 1
        %v1857 = vsel %vm458, %v1854, %v1856
        %v1858 = vrot.slane %v1399, 1
        %v1859 = vsel %vm458, %v1856, %v1858
        %v1860 = vrot.slane %v1400, 1
        %v1861 = vsel %vm458, %v1858, %v1860
        %v1862 = vrot.slane %v1401, 1
        %v1863 = vsel %vm458, %v1860, %v1862
        %v1864 = vrot.slane %v1402, 1
        %v1865 = vsel %vm458, %v1862, %v1864
        %v1866 = vrot.slane %v1420, 1
        %v1867 = vsel %vm458, %v1864, %v1866
        %v1893 = vunpack.c.l.b16 %v1826
        %v1894 = vunpack.c.l.b16 %v1827
        %v1895 = vunpack.c.l.b16 %v1828
        %v1896 = vunpack.c.l.b16 %v1829
        %v1897 = vunpack.c.l.b16 %v1830
        %v1898 = vunpack.c.l.b16 %v1831
        %v1899 = vunpack.c.l.b16 %v1832
        %v1900 = vunpack.c.l.b16 %v1833
        %v1901 = vunpack.c.l.b16 %v1834
        %v1902 = vunpack.c.l.b16 %v1835
        %v1903 = vunpack.c.l.b16 %v1836
        %v1904 = vunpack.c.l.b16 %v1837
        %v1905 = vunpack.c.l.b16 %v1838
        %v1906 = vunpack.c.l.b16 %v1839
        %v1907 = vunpack.c.l.b16 %v1840
        %v1908 = vunpack.c.l.b16 %v1841
        %v1909 = vpack.c.b16 %v1894, %v1893
        %v1910 = vpack.c.b16 %v1896, %v1895
        %v1911 = vpack.c.b16 %v1898, %v1897
        %v1912 = vpack.c.b16 %v1900, %v1899
        %v1913 = vpack.c.b16 %v1902, %v1901
        %v1914 = vpack.c.b16 %v1904, %v1903
        %v1915 = vpack.c.b16 %v1906, %v1905
        %v1916 = vpack.c.b16 %v1908, %v1907
        %1925 = vmatprep.subr.bf16.mxu0 0
        %1926 = vmatpush1.bf16.msra.mxu0 %v1909
        %1927 = vmatprep.subr.bf16.mxu0 0
        %1928 = vmatpush1.bf16.msra.mxu0 %v1910
        %1929 = vmatprep.subr.bf16.mxu0 0
        %1930 = vmatpush1.bf16.msra.mxu0 %v1911
        %1931 = vmatprep.subr.bf16.mxu0 0
        %1932 = vmatpush1.bf16.msra.mxu0 %v1912
        %1933 = vmatprep.subr.bf16.mxu0 0
        %1934 = vmatpush1.bf16.msra.mxu0 %v1913
        %1935 = vmatprep.subr.bf16.mxu0 0
        %1936 = vmatpush1.bf16.msra.mxu0 %v1914
        %1937 = vmatprep.subr.bf16.mxu0 0
        %1938 = vmatpush1.bf16.msra.mxu0 %v1915
        %1939 = vmatprep.subr.bf16.mxu0 0
        %1940 = vmatpush1.bf16.msra.mxu0 %v1916
        %1941 = vmatprep.subr.bf16.mxu0 0
        %1942 = vmatpush1.bf16.msra.mxu0 0
        %1943 = vmatprep.subr.bf16.mxu0 0
        %1944 = vmatpush1.bf16.msra.mxu0 0
        %1945 = vmatprep.subr.bf16.mxu0 0
        %1946 = vmatpush1.bf16.msra.mxu0 0
        %1947 = vmatprep.subr.bf16.mxu0 0
        %1948 = vmatpush1.bf16.msra.mxu0 0
        %1949 = vmatprep.subr.bf16.mxu0 0
        %1950 = vmatpush1.bf16.msra.mxu0 0
        %1951 = vmatprep.subr.bf16.mxu0 0
        %1952 = vmatpush1.bf16.msra.mxu0 0
        %1953 = vmatprep.subr.bf16.mxu0 0
        %1954 = vmatpush1.bf16.msra.mxu0 0
        %1955 = vmatprep.subr.bf16.mxu0 0
        %1956 = vmatpush1.bf16.msra.mxu0 0
        %1957 = vmatprep.mubr.bf16.mxu0 0
        %1958 = vmatmul.mubr.bf16.gmra.mrb[0].mxu0 %v1853
        %v1959 = vpop.f32.mrb[0].mxu0
        %v1960 = vadd.f32 0.0, %v1959
        %v1961 = vpop.f32.mrb[0].mxu0
        %v1962 = vpop.f32.mrb[0].mxu0
        %v1963 = vadd.f32 0.0, %v1962
        %v1964 = vpop.f32.mrb[0].mxu0
        %1965 = vmatprep.mubr.bf16.mxu0 0
        %1966 = vmatmul.mubr.bf16.gmra.mrb[0].mxu0 %v1855
        %v1967 = vpop.f32.mrb[0].mxu0
        %v1968 = vadd.f32 0.0, %v1967
        %v1969 = vpop.f32.mrb[0].mxu0
        %v1970 = vpop.f32.mrb[0].mxu0
        %v1971 = vadd.f32 0.0, %v1970
        %v1972 = vpop.f32.mrb[0].mxu0
        %1973 = vmatprep.mubr.bf16.mxu0 0
        %1974 = vmatmul.mubr.bf16.gmra.mrb[0].mxu0 %v1857
        %v1975 = vpop.f32.mrb[0].mxu0
        %v1976 = vadd.f32 0.0, %v1975
        %v1977 = vpop.f32.mrb[0].mxu0
        %v1978 = vpop.f32.mrb[0].mxu0
        %v1979 = vadd.f32 0.0, %v1978
        %v1980 = vpop.f32.mrb[0].mxu0
        %1981 = vmatprep.mubr.bf16.mxu0 0
        %1982 = vmatmul.mubr.bf16.gmra.mrb[0].mxu0 %v1859
        %v1983 = vpop.f32.mrb[0].mxu0
        %v1984 = vadd.f32 0.0, %v1983
        %v1985 = vpop.f32.mrb[0].mxu0
        %v1986 = vpop.f32.mrb[0].mxu0
        %v1987 = vadd.f32 0.0, %v1986
        %v1988 = vpop.f32.mrb[0].mxu0
        %1989 = vmatprep.mubr.bf16.mxu0 0
        %1990 = vmatmul.mubr.bf16.gmra.mrb[0].mxu0 %v1861
        %v1991 = vpop.f32.mrb[0].mxu0
        %v1992 = vadd.f32 0.0, %v1991
        %v1993 = vpop.f32.mrb[0].mxu0
        %v1994 = vpop.f32.mrb[0].mxu0
        %v1995 = vadd.f32 0.0, %v1994
        %v1996 = vpop.f32.mrb[0].mxu0
        %1997 = vmatprep.mubr.bf16.mxu0 0
        %1998 = vmatmul.mubr.bf16.gmra.mrb[0].mxu0 %v1863
        %v1999 = vpop.f32.mrb[0].mxu0
        %v2000 = vadd.f32 0.0, %v1999
        %v2001 = vpop.f32.mrb[0].mxu0
        %v2002 = vpop.f32.mrb[0].mxu0
        %v2003 = vadd.f32 0.0, %v2002
        %v2004 = vpop.f32.mrb[0].mxu0
        %2005 = vmatprep.mubr.bf16.mxu0 0
        %2006 = vmatmul.mubr.bf16.gmra.mrb[0].mxu0 %v1865
        %v2007 = vpop.f32.mrb[0].mxu0
        %v2008 = vadd.f32 0.0, %v2007
        %v2009 = vpop.f32.mrb[0].mxu0
        %v2010 = vpop.f32.mrb[0].mxu0
        %v2011 = vadd.f32 0.0, %v2010
        %v2012 = vpop.f32.mrb[0].mxu0
        %2013 = vmatprep.mubr.bf16.mxu0 0
        %2014 = vmatmul.mubr.bf16.gmra.mrb[0].mxu0 %v1867
        %v2015 = vpop.f32.mrb[0].mxu0
        %v2016 = vadd.f32 0.0, %v2015
        %v2017 = vpop.f32.mrb[0].mxu0
        %v2018 = vpop.f32.mrb[0].mxu0
        %v2019 = vadd.f32 0.0, %v2018
        %v2020 = vpop.f32.mrb[0].mxu0
        %2021 = vmatprep.mubr.bf16.mxu0 0
        %2022 = vmatmul.mubr.bf16.gmra.mrb[0].mxu0 %v1866
        %v2023 = vpop.f32.mrb[0].mxu0
        %v2024 = vadd.f32 0.0, %v2023
        %v2025 = vpop.f32.mrb[0].mxu0
        %v2026 = vpop.f32.mrb[0].mxu0
        %v2027 = vadd.f32 0.0, %v2026
        %v2028 = vpop.f32.mrb[0].mxu0
        %2029 = vdwg.mxu0
        %v2030 = vadd.f32 %v1754, %v1960
        %v2031 = vadd.f32 %v1757, %v1963
        %v2032 = vadd.f32 %v1762, %v1968
        %v2033 = vadd.f32 %v1765, %v1971
        %v2034 = vadd.f32 %v1770, %v1976
        %v2035 = vadd.f32 %v1773, %v1979
        %v2036 = vadd.f32 %v1778, %v1984
        %v2037 = vadd.f32 %v1781, %v1987
        %v2038 = vadd.f32 %v1786, %v1992
        %v2039 = vadd.f32 %v1789, %v1995
        %v2040 = vadd.f32 %v1794, %v2000
        %v2041 = vadd.f32 %v1797, %v2003
        %v2042 = vadd.f32 %v1802, %v2008
        %v2043 = vadd.f32 %v1805, %v2011
        %v2044 = vadd.f32 %v1810, %v2016
        %v2045 = vadd.f32 %v1813, %v2019
        %v2046 = vadd.f32 %v1818, %v2024
        %v2047 = vadd.f32 %v1821, %v2027
        %v2048 = vlaneseq
        %v2049 = vshrl.u32 %v2048, 7
        %v2050 = vsub.s32 0, %v2049
        %v2051 = vrot.slane %v251, %v2050
        %v2052 = vmul.f32 %v2030, %v2051
        %v2053 = vmul.f32 %v2031, %v2051
        %v2054 = vlaneseq
        %v2055 = vshrl.u32 %v2054, 7
        %v2056 = vsub.s32 0, %v2055
        %v2057 = vrot.slane %v252, %v2056
        %v2058 = vadd.f32 %v2052, %v2057
        %v2059 = vadd.f32 %v2053, %v2057
        %v2060 = vld [vmem:[%s213] sm:$0xf]
        %v2061 = vld [vmem:[%s213 + $0x4] sm:$0xf]
        %v2062 = vunpack.c.l.bf16 %v2060
        %v2063 = vunpack.c.l.bf16 %v2061
        %v2064 = vadd.f32 %v2058, %v2062
        %v2065 = vadd.f32 %v2059, %v2063
        %v2066 = vmax.f32 %v2064, 0.0
        %v2067 = vmax.f32 %v2065, 0.0
        %v2068 = vpack.c.bf16 %v2067, %v2066
        %v2070 = vunpack.c.l.b16 %v2068
        %v2071 = vunpack.c.h.b16 %v2068
        %v2072 = vpack.c.b16 %v2070, %v2070
        %v2073 = vpack.c.b16 %v2071, %v2071
        %2076 = vst [vmem:[%s245] sm:$0xf] %v2072
        %2077 = vst [vmem:[%s245 + $0x4] sm:$0xf] %v2073
        %v2078 = vmul.f32 %v2032, %v2051
        %v2079 = vmul.f32 %v2033, %v2051
        %v2080 = vmul.f32 %v2034, %v2051
        %v2081 = vadd.f32 %v2078, %v2057
        %v2082 = vadd.f32 %v2079, %v2057
        %v2083 = vadd.f32 %v2080, %v2057
        %v2084 = vld [vmem:[%s290] sm:$0xf]
        %v2085 = vld [vmem:[%s290 + $0x4] sm:$0xf]
        %v2086 = vunpack.c.l.bf16 %v2084
        %v2087 = vunpack.c.l.bf16 %v2085
        %vm2090 = vcmask 1041408
        %v2091 = vrot.slane %v2086, 6
        %v2092 = vrot.slane %v2087, 6
        %v2093 = vsel %vm2090, %v2091, %v2092
        %v2097 = vadd.f32 %v2081, %v2091
        %v2098 = vadd.f32 %v2082, %v2093
        %v2099 = vadd.f32 %v2083, %v2092
        %v2100 = vmax.f32 %v2097, 0.0
        %v2101 = vmax.f32 %v2098, 0.0
        %v2102 = vmax.f32 %v2099, 0.0
        %v2103 = vpack.c.bf16 %v2101, %v2100
        %v2104 = vpack.c.bf16 %v2102, %v2102
        %v2107 = vunpack.c.l.b16 %v2103
        %v2108 = vunpack.c.h.b16 %v2103
        %v2109 = vunpack.c.l.b16 %v2104
        %v2110 = vpack.c.b16 %v2107, %v2107
        %v2111 = vpack.c.b16 %v2108, %v2108
        %v2112 = vpack.c.b16 %v2109, %v2109
        %vm2113 = vcmask 1046532
        %vm2114 = vmor %vm342, %vm2113
        %v2115 = vrot.slane %v2110, 5
        %v2116 = vrot.slane %v2115, 4
        %v2117 = vrot.slane %v2111, 5
        %v2118 = vsel %vm2114, %v2116, %v2117
        %v2119 = vrot.slane %v2117, 4
        %v2120 = vrot.slane %v2112, 5
        %v2121 = vsel %vm2114, %v2119, %v2120
        %s2124 = scalar_lea.vmem %s245, 8 [#allocation9]
        %2125 = vst [vmem:[%s2124] sm:$0xf] %v2118
        %2126 = vst [vmem:[%s2124 + $0x4] sm:$0xf] %v2121
        %v2127 = vmul.f32 %v2035, %v2051
        %v2128 = vmul.f32 %v2036, %v2051
        %v2129 = vadd.f32 %v2127, %v2057
        %v2130 = vadd.f32 %v2128, %v2057
        %v2131 = vld [vmem:[%s319] sm:$0xf]
        %v2132 = vld [vmem:[%s319 + $0x4] sm:$0xf]
        %v2133 = vunpack.c.l.bf16 %v2131
        %v2134 = vunpack.c.l.bf16 %v2132
        %vm2137 = vcmask 1043456
        %v2138 = vrot.slane %v2133, 4
        %v2139 = vrot.slane %v2134, 4
        %v2140 = vsel %vm2137, %v2138, %v2139
        %v2144 = vadd.f32 %v2083, %v2138
        %v2145 = vadd.f32 %v2129, %v2140
        %v2146 = vadd.f32 %v2130, %v2139
        %v2147 = vmax.f32 %v2144, 0.0
        %v2148 = vmax.f32 %v2145, 0.0
        %v2149 = vmax.f32 %v2146, 0.0
        %v2150 = vpack.c.bf16 %v2148, %v2147
        %v2151 = vpack.c.bf16 %v2149, %v2149
        %v2154 = vunpack.c.l.b16 %v2150
        %v2155 = vunpack.c.h.b16 %v2150
        %v2156 = vunpack.c.l.b16 %v2151
        %v2157 = vpack.c.b16 %v2154, %v2154
        %v2158 = vpack.c.b16 %v2155, %v2155
        %v2159 = vpack.c.b16 %v2156, %v2156
        %vm2160 = vcmask 1045508
        %vm2161 = vmor %vm313, %vm2160
        %v2162 = vrot.slane %v2157, 6
        %v2163 = vrot.slane %v2162, 4
        %v2164 = vrot.slane %v2158, 6
        %v2165 = vsel %vm2161, %v2163, %v2164
        %v2166 = vrot.slane %v2164, 4
        %v2167 = vrot.slane %v2159, 6
        %v2168 = vsel %vm2161, %v2166, %v2167
        %s2171 = scalar_lea.vmem %s245, 16 [#allocation9]
        %2172 = vst [vmem:[%s2171] sm:$0xf] %v2165
        %2173 = vst [vmem:[%s2171 + $0x4] sm:$0xf] %v2168
        %v2174 = vmul.f32 %v2037, %v2051
        %v2175 = vmul.f32 %v2038, %v2051
        %v2176 = vadd.f32 %v2174, %v2057
        %v2177 = vadd.f32 %v2175, %v2057
        %v2178 = vld [vmem:[%s348] sm:$0xf]
        %v2179 = vld [vmem:[%s348 + $0x4] sm:$0xf]
        %v2180 = vunpack.c.l.bf16 %v2178
        %v2181 = vunpack.c.l.bf16 %v2179
        %vm2184 = vcmask 1045504
        %v2185 = vrot.slane %v2180, 2
        %v2186 = vrot.slane %v2181, 2
        %v2187 = vsel %vm2184, %v2185, %v2186
        %v2191 = vadd.f32 %v2130, %v2185
        %v2192 = vadd.f32 %v2176, %v2187
        %v2193 = vadd.f32 %v2177, %v2186
        %v2194 = vmax.f32 %v2191, 0.0
        %v2195 = vmax.f32 %v2192, 0.0
        %v2196 = vmax.f32 %v2193, 0.0
        %v2197 = vpack.c.bf16 %v2195, %v2194
        %v2198 = vpack.c.bf16 %v2196, %v2196
        %v2201 = vunpack.c.l.b16 %v2197
        %v2202 = vunpack.c.h.b16 %v2197
        %v2203 = vunpack.c.l.b16 %v2198
        %v2204 = vpack.c.b16 %v2201, %v2201
        %v2205 = vpack.c.b16 %v2202, %v2202
        %v2206 = vpack.c.b16 %v2203, %v2203
        %vm2207 = vcmask 1044484
        %vm2208 = vmor %vm284, %vm2207
        %v2209 = vrot.slane %v2204, 7
        %v2210 = vrot.slane %v2209, 4
        %v2211 = vrot.slane %v2205, 7
        %v2212 = vsel %vm2208, %v2210, %v2211
        %v2213 = vrot.slane %v2211, 4
        %v2214 = vrot.slane %v2206, 7
        %v2215 = vsel %vm2208, %v2213, %v2214
        %s2218 = scalar_lea.vmem %s245, 24 [#allocation9]
        %2219 = vst [vmem:[%s2218] sm:$0xf] %v2212
        %2220 = vst [vmem:[%s2218 + $0x4] sm:$0xf] %v2215
        %v2221 = vmul.f32 %v2039, %v2051
        %v2222 = vmul.f32 %v2040, %v2051
        %v2223 = vadd.f32 %v2221, %v2057
        %v2224 = vadd.f32 %v2222, %v2057
        %v2225 = vld [vmem:[%s377] sm:$0xf]
        %v2226 = vld [vmem:[%s377 + $0x4] sm:$0xf]
        %v2227 = vunpack.c.l.bf16 %v2225
        %v2228 = vunpack.c.l.bf16 %v2226
        %v2229 = vadd.f32 %v2223, %v2227
        %v2230 = vadd.f32 %v2224, %v2228
        %v2231 = vmax.f32 %v2229, 0.0
        %v2232 = vmax.f32 %v2230, 0.0
        %v2233 = vpack.c.bf16 %v2232, %v2231
        %v2235 = vunpack.c.l.b16 %v2233
        %v2236 = vunpack.c.h.b16 %v2233
        %v2237 = vpack.c.b16 %v2235, %v2235
        %v2238 = vpack.c.b16 %v2236, %v2236
        %s2241 = scalar_lea.vmem %s245, 32 [#allocation9]
        %2242 = vst [vmem:[%s2241] sm:$0xf] %v2237
        %2243 = vst [vmem:[%s2241 + $0x4] sm:$0xf] %v2238
        %v2244 = vmul.f32 %v2041, %v2051
        %v2245 = vmul.f32 %v2042, %v2051
        %v2246 = vmul.f32 %v2043, %v2051
        %v2247 = vadd.f32 %v2244, %v2057
        %v2248 = vadd.f32 %v2245, %v2057
        %v2249 = vadd.f32 %v2246, %v2057
        %v2250 = vld [vmem:[%s406] sm:$0xf]
        %v2251 = vld [vmem:[%s406 + $0x4] sm:$0xf]
        %v2252 = vunpack.c.l.bf16 %v2250
        %v2253 = vunpack.c.l.bf16 %v2251
        %v2256 = vrot.slane %v2252, 6
        %v2257 = vrot.slane %v2253, 6
        %v2258 = vsel %vm2090, %v2256, %v2257
        %v2262 = vadd.f32 %v2247, %v2256
        %v2263 = vadd.f32 %v2248, %v2258
        %v2264 = vadd.f32 %v2249, %v2257
        %v2265 = vmax.f32 %v2262, 0.0
        %v2266 = vmax.f32 %v2263, 0.0
        %v2267 = vmax.f32 %v2264, 0.0
        %v2268 = vpack.c.bf16 %v2266, %v2265
        %v2269 = vpack.c.bf16 %v2267, %v2267
        %v2272 = vunpack.c.l.b16 %v2268
        %v2273 = vunpack.c.h.b16 %v2268
        %v2274 = vunpack.c.l.b16 %v2269
        %v2275 = vpack.c.b16 %v2272, %v2272
        %v2276 = vpack.c.b16 %v2273, %v2273
        %v2277 = vpack.c.b16 %v2274, %v2274
        %v2278 = vrot.slane %v2275, 5
        %v2279 = vrot.slane %v2278, 4
        %v2280 = vrot.slane %v2276, 5
        %v2281 = vsel %vm2114, %v2279, %v2280
        %v2282 = vrot.slane %v2280, 4
        %v2283 = vrot.slane %v2277, 5
        %v2284 = vsel %vm2114, %v2282, %v2283
        %s2287 = scalar_lea.vmem %s245, 40 [#allocation9]
        %2288 = vst [vmem:[%s2287] sm:$0xf] %v2281
        %2289 = vst [vmem:[%s2287 + $0x4] sm:$0xf] %v2284
        %v2290 = vmul.f32 %v2044, %v2051
        %v2291 = vmul.f32 %v2045, %v2051
        %v2292 = vadd.f32 %v2290, %v2057
        %v2293 = vadd.f32 %v2291, %v2057
        %v2294 = vld [vmem:[%s435] sm:$0xf]
        %v2295 = vld [vmem:[%s435 + $0x4] sm:$0xf]
        %v2296 = vunpack.c.l.bf16 %v2294
        %v2297 = vunpack.c.l.bf16 %v2295
        %v2300 = vrot.slane %v2296, 4
        %v2301 = vrot.slane %v2297, 4
        %v2302 = vsel %vm2137, %v2300, %v2301
        %v2306 = vadd.f32 %v2249, %v2300
        %v2307 = vadd.f32 %v2292, %v2302
        %v2308 = vadd.f32 %v2293, %v2301
        %v2309 = vmax.f32 %v2306, 0.0
        %v2310 = vmax.f32 %v2307, 0.0
        %v2311 = vmax.f32 %v2308, 0.0
        %v2312 = vpack.c.bf16 %v2310, %v2309
        %v2313 = vpack.c.bf16 %v2311, %v2311
        %v2316 = vunpack.c.l.b16 %v2312
        %v2317 = vunpack.c.h.b16 %v2312
        %v2318 = vunpack.c.l.b16 %v2313
        %v2319 = vpack.c.b16 %v2316, %v2316
        %v2320 = vpack.c.b16 %v2317, %v2317
        %v2321 = vpack.c.b16 %v2318, %v2318
        %v2322 = vrot.slane %v2319, 6
        %v2323 = vrot.slane %v2322, 4
        %v2324 = vrot.slane %v2320, 6
        %v2325 = vsel %vm2161, %v2323, %v2324
        %v2326 = vrot.slane %v2324, 4
        %v2327 = vrot.slane %v2321, 6
        %v2328 = vsel %vm2161, %v2326, %v2327
        %s2331 = scalar_lea.vmem %s245, 48 [#allocation9]
        %2332 = vst [vmem:[%s2331] sm:$0xf] %v2325
        %2333 = vst [vmem:[%s2331 + $0x4] sm:$0xf] %v2328
        %v2334 = vmul.f32 %v2046, %v2051
        %v2335 = vmul.f32 %v2047, %v2051
        %v2336 = vadd.f32 %v2334, %v2057
        %v2337 = vadd.f32 %v2335, %v2057
        %v2338 = vld [vmem:[%s464] sm:$0xf]
        %v2339 = vld [vmem:[%s464 + $0x4] sm:$0xf]
        %v2340 = vunpack.c.l.bf16 %v2338
        %v2341 = vunpack.c.l.bf16 %v2339
        %v2344 = vrot.slane %v2340, 2
        %v2345 = vrot.slane %v2341, 2
        %v2346 = vsel %vm2184, %v2344, %v2345
        %v2350 = vadd.f32 %v2293, %v2344
        %v2351 = vadd.f32 %v2336, %v2346
        %v2352 = vadd.f32 %v2337, %v2345
        %v2353 = vmax.f32 %v2350, 0.0
        %v2354 = vmax.f32 %v2351, 0.0
        %v2355 = vmax.f32 %v2352, 0.0
        %v2356 = vpack.c.bf16 %v2354, %v2353
        %v2357 = vpack.c.bf16 %v2355, %v2355
        %v2360 = vunpack.c.l.b16 %v2356
        %v2361 = vunpack.c.h.b16 %v2356
        %v2362 = vunpack.c.l.b16 %v2357
        %v2363 = vpack.c.b16 %v2360, %v2360
        %v2364 = vpack.c.b16 %v2361, %v2361
        %v2365 = vpack.c.b16 %v2362, %v2362
        %v2366 = vrot.slane %v2363, 7
        %v2367 = vrot.slane %v2366, 4
        %v2368 = vrot.slane %v2364, 7
        %v2369 = vsel %vm2208, %v2367, %v2368
        %v2370 = vrot.slane %v2368, 4
        %v2371 = vrot.slane %v2365, 7
        %v2372 = vsel %vm2208, %v2370, %v2371
        %s2375 = scalar_lea.vmem %s245, 56 [#allocation9]
        %2376 = vst [vmem:[%s2375] sm:$0xf] %v2369
        %2377 = vst [vmem:[%s2375 + $0x4] sm:$0xf] %v2372
        %s2378 = sand.u32 %s119, 1
        %s2379 = scalar_lea.sflag [#allocation5], %s2378
        %s2380 = sand.u32 %s119, 1
        %s2381 = smul.addr %s2380, 64
        %s2382 = scalar_lea.vmem [#allocation9], %s2381
        // Predicated region
        $region49: #{tpu_custom_call.1} parent=35 // pred_check
          %p2383 = pneg %p129
        $region50: #{tpu_custom_call.1} parent=35 // pred_check_branch
          %2385 = sbr.rel (%p2383) target = $region52
        $region51: #{tpu_custom_call.1} parent=35 // pred_region
          %s2386 = smul.u32 8, %s22
          %s2388 = ssub.s32 1024, 1024
          %2389 = vsyncadd %s2379, %s2388
          %s2390 = smul.addr %s2386, 2
          %s2391 = smul.addr %s2390, 64
          %s2392 = scalar_lea.hbm %s4, %s2391
          %s2393 = sshll.u32 %s2382, 4
          %s2394 = int_to_ptr.vmem [resolvable:$true] %s2393
          %2399 = dma.vmem_to_hbm [thread:$0]  %s2394, 1024, %s2392, %s2379, 64, 64, 4
        $region52: #{tpu_custom_call.1} parent=35 // pred_fallthru
          _
      $region36: #{tpu_custom_call.1} parent=5 // pred_fallthru
        _
      %p2400 = scmp.le.s32.totalorder 2, %s17
      // Predicated region
      $region53: #{tpu_custom_call.1} parent=5 // pred_check
        %p2401 = pneg %p2400
      $region54: #{tpu_custom_call.1} parent=5 // pred_check_branch
        %2403 = sbr.rel (%p2401) target = $region56
      $region55: #{tpu_custom_call.1} parent=5 // pred_region
        %s2404 = ssub.s32 %s17, 2
        // Predicated region
        $region57: #{tpu_custom_call.1} parent=55 // pred_check
          %p2405 = pneg %p135
        $region58: #{tpu_custom_call.1} parent=55 // pred_check_branch
          %2407 = sbr.rel (%p2405) target = $region60
        $region59: #{tpu_custom_call.1} parent=55 // pred_region
          %s2408 = sand.u32 %s120, 1
          %s2409 = scalar_lea.sflag [#allocation5], %s2408
          %s2410 = sand.u32 %s120, 1
          %s2411 = smul.addr %s2410, 64
          %s2412 = scalar_lea.vmem [#allocation9], %s2411
          %2413 = dma.done %s2409, 1024
        $region60: #{tpu_custom_call.1} parent=55 // pred_fallthru
          _
      $region56: #{tpu_custom_call.1} parent=5 // pred_fallthru
        _
    $region6: #{tpu_custom_call.1} parent=1 // loop_footer
      %s21 = sadd.s32 1, %s17
    $region7: #{tpu_custom_call.1} parent=1 // loop_footer_branch
      %16 = sbr.rel target = $region3
    $region8: #{tpu_custom_call.1} parent=1 // loop_exit
      _
    %2414 = vsyncpa [#allocation4], 1
    %s2415 = scalar_lea.sflag [#allocation4], 1
    %2416 = vsyncpa %s2415, 1
    %2417 = vsyncpa [#allocation7], 1
    %2418 = vsyncpa [#allocation5], 1
    %s2419 = scalar_lea.sflag [#allocation5], 1
    %2420 = vsyncpa %s2419, 1

</llo_original>
